<compile_context>
chip_gen: v7x
topology: tpu7x:2x2x1
jax: 0.10.0
libtpu: 0.0.40
codegen_flags: <defaults>
</compile_context>

<pallas_src>
import jax
import jax.numpy as jnp
from jax.experimental import pallas as pl
from jax.experimental.pallas import tpu as pltpu

IN_FEATURES = 10
OUT_FEATURES = 5
GROUP = 128                       # rows packed per lane-dense group
IN_FLAT = GROUP * IN_FEATURES     # 1280 (multiple of 128 lanes)
OUT_FLAT = GROUP * OUT_FEATURES   # 640  (multiple of 128 lanes)


def _round_up(n, m):
    return ((n + m - 1) // m) * m


def prepare_params(w, b):
    """One-time packing of nn.Linear(10, 5) params (do at init, not per call).

    w: (5, 10), b: (5,) ->
      w_big: (1280, 640) block-diagonal replication of w.T (one 10x5 block
             per packed row), b_big: (1, 640) bias tiled to the packed layout.
    """
    wt = jnp.asarray(w, jnp.float32).T                        # (IN, OUT)
    w_big = jnp.kron(jnp.eye(GROUP, dtype=jnp.float32), wt)   # (1280, 640)
    b_big = jnp.tile(jnp.asarray(b, jnp.float32), GROUP).reshape(1, OUT_FLAT)
    return w_big, b_big


def _linear_kernel(x_ref, w_ref, b_ref, o_ref):
    # x_ref: (Gs, 1280) packed rows (128 rows x 10 features / group), lane-dense
    # w_ref: (1280, 640) block-diagonal weights (grid-invariant, stays resident)
    # b_ref: (1, 640)    bias tiled to packed output layout (grid-invariant)
    # o_ref: (Gs, 640)   packed output (128 rows x 5 features / group), lane-dense
    acc = jnp.dot(x_ref[...], w_ref[...], preferred_element_type=jnp.float32)
    o_ref[...] = acc + b_ref[...]


def linear_pallas(x, w_big, b_big, *, rows_per_step=16384):
    """y = x @ w.T + b (torch.nn.Linear(10, 5) forward) with packed params."""
    x = jnp.asarray(x, jnp.float32)
    B = x.shape[0]

    # Row tiling: groups of 128 rows; tile = groups_per_step groups.
    groups_per_step = max(8, (max(1, rows_per_step // GROUP) // 8) * 8)
    n_groups = -(-B // GROUP)
    n_groups_pad = _round_up(n_groups, 8)
    groups_per_step = min(groups_per_step, n_groups_pad)
    n_groups_pad = _round_up(n_groups_pad, groups_per_step)
    B_pad = n_groups_pad * GROUP

    # Pad-and-slice handles B not divisible by the row tile (wrapper side).
    if B_pad != B:
        x = jnp.pad(x, ((0, B_pad - B), (0, 0)))
    x_flat = x.reshape(n_groups_pad, IN_FLAT)   # free row-major view, lane-dense

    grid = (n_groups_pad // groups_per_step,)

    cost = pl.CostEstimate(
        flops=2 * B_pad * IN_FEATURES * OUT_FEATURES,
        transcendentals=0,
        bytes_accessed=(B_pad * (IN_FEATURES + OUT_FEATURES) * 4
                        + int(w_big.size) * 4 + int(b_big.size) * 4),
    )

    out_flat = pl.pallas_call(
        _linear_kernel,
        out_shape=jax.ShapeDtypeStruct((n_groups_pad, OUT_FLAT), jnp.float32),
        grid=grid,
        in_specs=[
            pl.BlockSpec((groups_per_step, IN_FLAT), lambda i: (i, 0)),
            pl.BlockSpec((IN_FLAT, OUT_FLAT), lambda i: (0, 0)),   # resident
            pl.BlockSpec((1, OUT_FLAT), lambda i: (0, 0)),         # resident
        ],
        out_specs=pl.BlockSpec((groups_per_step, OUT_FLAT), lambda i: (i, 0)),
        compiler_params=pltpu.CompilerParams(
            dimension_semantics=("parallel",)),
        cost_estimate=cost,
    )(x_flat, w_big, b_big)

    y = out_flat.reshape(B_pad, OUT_FEATURES)
    return y[:B] if B_pad != B else y


if __name__ == "__main__":
    key = jax.random.PRNGKey(0)
    kx, kw, kb, kx2 = jax.random.split(key, 4)

    # Deterministic parameter init (synthetic; shapes from nn.Linear(10, 5)).
    bound = 1.0 / (IN_FEATURES ** 0.5)
    w = jax.random.uniform(kw, (OUT_FEATURES, IN_FEATURES),
                           minval=-bound, maxval=bound, dtype=jnp.float32)
    b = jax.random.uniform(kb, (OUT_FEATURES,),
                           minval=-bound, maxval=bound, dtype=jnp.float32)
    w_big, b_big = prepare_params(w, b)   # packed once, reused across calls

    # Primary small example consistent with the module: batch=8, features=10.
    x = jax.random.normal(kx, (8, IN_FEATURES), dtype=jnp.float32)
    y = linear_pallas(x, w_big, b_big)
    jax.block_until_ready(y)
    y_ref = x @ w.T + b
    assert y.shape == (8, OUT_FEATURES)
    assert jnp.allclose(y, y_ref, atol=1e-4, rtol=1e-4)

    # Second check: multi-step grid + non-aligned batch (tiling / pad path).
    x2 = jax.random.normal(kx2, (2000, IN_FEATURES), dtype=jnp.float32)
    y2 = linear_pallas(x2, w_big, b_big, rows_per_step=1024)
    jax.block_until_ready(y2)
    y2_ref = x2 @ w.T + b
    assert y2.shape == (2000, OUT_FEATURES)
    assert jnp.allclose(y2, y2_ref, atol=1e-4, rtol=1e-4)

    print("KERNEL_OK")
</pallas_src>

<mosaic_0001>
module attributes {stable_mosaic.version = 11 : i64} {
  func.func @_linear_kernel(%arg0: i32, %arg1: memref<8x1280xf32, #tpu.memory_space<vmem>>, %arg2: memref<1280x640xf32, #tpu.memory_space<vmem>>, %arg3: memref<1x640xf32, #tpu.memory_space<vmem>>, %arg4: memref<8x640xf32, #tpu.memory_space<vmem>>) attributes {dimension_semantics = [#tpu.dimension_semantics<parallel>], iteration_bounds = array<i64: 1>, scalar_prefetch = 0 : i64, scratch_operands = 0 : i64, tpu.core_type = #tpu.core_type<tc>, window_params = [{transform_indices = @transform_0, window_bounds = array<i64: 8, 1280>}, {pipeline_mode = #tpu.pipeline_mode<synchronous>, transform_indices = @transform_1, window_bounds = array<i64: 1280, 640>}, {pipeline_mode = #tpu.pipeline_mode<synchronous>, transform_indices = @transform_2, window_bounds = array<i64: 1, 640>}, {transform_indices = @transform_3, window_bounds = array<i64: 8, 640>}]} {
    %c0 = arith.constant 0 : index
    %c0_0 = arith.constant 0 : index
    %0 = vector.load %arg1[%c0, %c0_0] : memref<8x1280xf32, #tpu.memory_space<vmem>>, vector<8x1280xf32>
    %c0_1 = arith.constant 0 : index
    %c0_2 = arith.constant 0 : index
    %1 = vector.load %arg2[%c0_1, %c0_2] : memref<1280x640xf32, #tpu.memory_space<vmem>>, vector<1280x640xf32>
    %cst = arith.constant dense<0.000000e+00> : vector<8x640xf32>
    %2 = tpu.matmul %0, %1, %cst {dimension_numbers = #tpu.dot_dimension_numbers<[1], [0], [0], [1], [0, 0, 1, 1], [], []>} : vector<8x1280xf32>, vector<1280x640xf32>, vector<8x640xf32> -> vector<8x640xf32>
    %c0_3 = arith.constant 0 : index
    %c0_4 = arith.constant 0 : index
    %3 = vector.load %arg3[%c0_3, %c0_4] : memref<1x640xf32, #tpu.memory_space<vmem>>, vector<1x640xf32>
    %4 = vector.broadcast %3 : vector<1x640xf32> to vector<8x640xf32>
    %5 = arith.addf %2, %4 : vector<8x640xf32>
    %c0_5 = arith.constant 0 : index
    %c0_6 = arith.constant 0 : index
    %6 = vector.load %arg4[%c0_5, %c0_6] : memref<8x640xf32, #tpu.memory_space<vmem>>, vector<8x640xf32>
    tpu.vector_store %arg4[%c0_5, %c0_6], %5 {strides = array<i32>} : memref<8x640xf32, #tpu.memory_space<vmem>>, vector<8x640xf32>,
    return
  }
  func.func @transform_0(%arg0: i32) -> (i32, i32) {
    %c0_i32 = arith.constant 0 : i32
    %c0_i32_0 = arith.constant 0 : i32
    return %arg0, %c0_i32 : i32, i32
  }
  func.func @transform_1(%arg0: i32) -> (i32, i32) {
    %c0_i32 = arith.constant 0 : i32
    %c0_i32_0 = arith.constant 0 : i32
    %c0_i32_1 = arith.constant 0 : i32
    return %c0_i32, %c0_i32_0 : i32, i32
  }
  func.func @transform_2(%arg0: i32) -> (i32, i32) {
    %c0_i32 = arith.constant 0 : i32
    %c0_i32_0 = arith.constant 0 : i32
    %c0_i32_1 = arith.constant 0 : i32
    return %c0_i32, %c0_i32_0 : i32, i32
  }
  func.func @transform_3(%arg0: i32) -> (i32, i32) {
    %c0_i32 = arith.constant 0 : i32
    %c0_i32_0 = arith.constant 0 : i32
    return %arg0, %c0_i32 : i32, i32
  }
}

</mosaic_0001>

<llo_original>
// kernel: tpu_custom_call.1
$region0: #{tpu_custom_call.1}
  #allocation0 [shape = 'u32[]', space=smem, size = 0x4, offset = 0x4, fixed_abs, tag = 'smem constant byte address 0x4 - core index']
  #allocation1 [shape = 'u32[144,128]{1,0:T(1,128)}', space=vmem, size = 0x12000, scoped, tag = 'internal scratch']
  %s0 = inlined_call_operand.hbm [shape: f32[8,1280], index: 0, kind: input, shape index: {}]
  %s1 = inlined_call_operand.hbm [shape: f32[1280,640], index: 1, kind: input, shape index: {}]
  %s2 = inlined_call_operand.hbm [shape: f32[1,640], index: 2, kind: input, shape index: {}]
  %s3 = inlined_call_operand.hbm [shape: f32[8,640], index: 3, kind: output, shape index: {}]
  %s4 = sld [smem:[#allocation0]]
  $region34: #{tpu_custom_call.1} parent=0
    _
  %s6 = ssub.s32 1, %s4
  %s7 = scalar_select 0, %s6, %s4
  $region1: #{tpu_custom_call.1} parent=0
    #allocation2 [shape = 'u8[40960]{0}', space=vmem, size = 0xa000, scoped, tag = 'input window, operand 0, single buffered']
    #allocation3 [shape = 's32[1]{0}', space=sflag, size = 0x4, scoped, tag = 'scoped memory for tpu_custom_call.1']
    #allocation4 [shape = 's32[1]{0}', space=sflag, size = 0x4, scoped, tag = 'scoped memory for tpu_custom_call.1']
    #allocation5 [shape = 'u8[3276800]{0}', space=vmem, size = 0x320000, scoped, tag = 'input window, operand 1, single buffered']
    #allocation6 [shape = 's32[1]{0}', space=sflag, size = 0x4, scoped, tag = 'scoped memory for tpu_custom_call.1']
    #allocation7 [shape = 'u8[2560]{0}', space=vmem, size = 0xc00, scoped, tag = 'input window, operand 2, single buffered']
    #allocation8 [shape = 'u8[20480]{0}', space=vmem, size = 0x5000, scoped, tag = 'output window, operand 0, single buffered']
    %8 = vsyncpa [#allocation3], 0
    %9 = vsyncpa [#allocation6], 0
    %10 = vsyncpa [#allocation4], 0
    // Predicated region
    $region2: #{tpu_custom_call.1} parent=1 // pred_check
      _
    $region3: #{tpu_custom_call.1} parent=1 // pred_check_branch
      %12 = sbr.rel (0) target = $region5
    $region4: #{tpu_custom_call.1} parent=1 // pred_region
      %s14 = ssub.s32 1280, 1280
      %15 = vsyncadd [#allocation3], %s14
      %s17 = sshll.u32 [#allocation2], 4
      %s18 = int_to_ptr.vmem [resolvable:$true] %s17
      %20 = dma.hbm_to_vmem [thread:$0]  %s0, 1280, %s18, [#allocation3]
    $region5: #{tpu_custom_call.1} parent=1 // pred_fallthru
      _
    // Predicated region
    $region6: #{tpu_custom_call.1} parent=1 // pred_check
      _
    $region7: #{tpu_custom_call.1} parent=1 // pred_check_branch
      %22 = sbr.rel (0) target = $region9
    $region8: #{tpu_custom_call.1} parent=1 // pred_region
      %s24 = ssub.s32 102400, 102400
      %25 = vsyncadd [#allocation6], %s24
      %s26 = sshll.u32 [#allocation5], 4
      %s27 = int_to_ptr.vmem [resolvable:$true] %s26
      %32 = dma.hbm_to_vmem [thread:$0]  %s1, 102400, %s27, [#allocation6], 640, 640, 40
    $region9: #{tpu_custom_call.1} parent=1 // pred_fallthru
      _
    // Predicated region
    $region10: #{tpu_custom_call.1} parent=1 // pred_check
      _
    $region11: #{tpu_custom_call.1} parent=1 // pred_check_branch
      %34 = sbr.rel (0) target = $region13
    $region12: #{tpu_custom_call.1} parent=1 // pred_region
      %s36 = ssub.s32 80, 80
      %37 = vsyncadd [#allocation6], %s36
      %s39 = sshll.u32 [#allocation7], 4
      %s40 = int_to_ptr.vmem [resolvable:$true] %s39
      %42 = dma.hbm_to_vmem [thread:$0]  %s2, 80, %s40, [#allocation6]
    $region13: #{tpu_custom_call.1} parent=1 // pred_fallthru
      _
    // Predicated region
    $region14: #{tpu_custom_call.1} parent=1 // pred_check
      _
    $region15: #{tpu_custom_call.1} parent=1 // pred_check_branch
      %44 = sbr.rel (0) target = $region17
    $region16: #{tpu_custom_call.1} parent=1 // pred_region
      %45 = dma.done [#allocation3], 1280
    $region17: #{tpu_custom_call.1} parent=1 // pred_fallthru
      _
    // Predicated region
    $region18: #{tpu_custom_call.1} parent=1 // pred_check
      _
    $region19: #{tpu_custom_call.1} parent=1 // pred_check_branch
      %47 = sbr.rel (0) target = $region21
    $region20: #{tpu_custom_call.1} parent=1 // pred_region
      %48 = dma.done [#allocation6], 102400
    $region21: #{tpu_custom_call.1} parent=1 // pred_fallthru
      _
    // Predicated region
    $region22: #{tpu_custom_call.1} parent=1 // pred_check
      _
    $region23: #{tpu_custom_call.1} parent=1 // pred_check_branch
      %50 = sbr.rel (0) target = $region25
    $region24: #{tpu_custom_call.1} parent=1 // pred_region
      %51 = dma.done [#allocation6], 80
    $region25: #{tpu_custom_call.1} parent=1 // pred_fallthru
      _
    %v52 = vld [vmem:[#allocation2] sm:$0xff]
    %v53 = vld [vmem:[#allocation2 + $0x8] sm:$0xff]
    %v54 = vld [vmem:[#allocation2 + $0x10] sm:$0xff]
    %v55 = vld [vmem:[#allocation2 + $0x18] sm:$0xff]
    %v56 = vld [vmem:[#allocation2 + $0x20] sm:$0xff]
    %v57 = vld [vmem:[#allocation2 + $0x28] sm:$0xff]
    %v58 = vld [vmem:[#allocation2 + $0x30] sm:$0xff]
    %v59 = vld [vmem:[#allocation2 + $0x38] sm:$0xff]
    %v60 = vld [vmem:[#allocation2 + $0x40] sm:$0xff]
    %v61 = vld [vmem:[#allocation2 + $0x48] sm:$0xff]
    %v62 = vld [vmem:[#allocation5] sm:$0xff]
    %v63 = vld [vmem:[#allocation5 + $0x8] sm:$0xff]
    %v64 = vld [vmem:[#allocation5 + $0x10] sm:$0xff]
    %v65 = vld [vmem:[#allocation5 + $0x18] sm:$0xff]
    %v66 = vld [vmem:[#allocation5 + $0x20] sm:$0xff]
    %v67 = vld [vmem:[#allocation5 + $0x28] sm:$0xff]
    %v68 = vld [vmem:[#allocation5 + $0x30] sm:$0xff]
    %v69 = vld [vmem:[#allocation5 + $0x38] sm:$0xff]
    %v70 = vld [vmem:[#allocation5 + $0x40] sm:$0xff]
    %v71 = vld [vmem:[#allocation5 + $0x48] sm:$0xff]
    %v72 = vld [vmem:[#allocation5 + $0x50] sm:$0xff]
    %v73 = vld [vmem:[#allocation5 + $0x58] sm:$0xff]
    %v74 = vld [vmem:[#allocation5 + $0x60] sm:$0xff]
    %v75 = vld [vmem:[#allocation5 + $0x68] sm:$0xff]
    %v76 = vld [vmem:[#allocation5 + $0x70] sm:$0xff]
    %v77 = vld [vmem:[#allocation5 + $0x78] sm:$0xff]
    %v78 = vld [vmem:[#allocation5 + $0x80] sm:$0xff]
    %v79 = vld [vmem:[#allocation5 + $0x88] sm:$0xff]
    %v80 = vld [vmem:[#allocation5 + $0x90] sm:$0xff]
    %v81 = vld [vmem:[#allocation5 + $0x98] sm:$0xff]
    %v82 = vld [vmem:[#allocation5 + $0xa0] sm:$0xff]
    %v83 = vld [vmem:[#allocation5 + $0xa8] sm:$0xff]
    %v84 = vld [vmem:[#allocation5 + $0xb0] sm:$0xff]
    %v85 = vld [vmem:[#allocation5 + $0xb8] sm:$0xff]
    %v86 = vld [vmem:[#allocation5 + $0xc0] sm:$0xff]
    %v87 = vld [vmem:[#allocation5 + $0xc8] sm:$0xff]
    %v88 = vld [vmem:[#allocation5 + $0xd0] sm:$0xff]
    %v89 = vld [vmem:[#allocation5 + $0xd8] sm:$0xff]
    %v90 = vld [vmem:[#allocation5 + $0xe0] sm:$0xff]
    %v91 = vld [vmem:[#allocation5 + $0xe8] sm:$0xff]
    %v92 = vld [vmem:[#allocation5 + $0xf0] sm:$0xff]
    %v93 = vld [vmem:[#allocation5 + $0xf8] sm:$0xff]
    %v94 = vld [vmem:[#allocation5 + $0x100] sm:$0xff]
    %v95 = vld [vmem:[#allocation5 + $0x108] sm:$0xff]
    %v96 = vld [vmem:[#allocation5 + $0x110] sm:$0xff]
    %v97 = vld [vmem:[#allocation5 + $0x118] sm:$0xff]
    %v98 = vld [vmem:[#allocation5 + $0x120] sm:$0xff]
    %v99 = vld [vmem:[#allocation5 + $0x128] sm:$0xff]
    %v100 = vld [vmem:[#allocation5 + $0x130] sm:$0xff]
    %v101 = vld [vmem:[#allocation5 + $0x138] sm:$0xff]
    %v102 = vld [vmem:[#allocation5 + $0x140] sm:$0xff]
    %v103 = vld [vmem:[#allocation5 + $0x148] sm:$0xff]
    %v104 = vld [vmem:[#allocation5 + $0x150] sm:$0xff]
    %v105 = vld [vmem:[#allocation5 + $0x158] sm:$0xff]
    %v106 = vld [vmem:[#allocation5 + $0x160] sm:$0xff]
    %v107 = vld [vmem:[#allocation5 + $0x168] sm:$0xff]
    %v108 = vld [vmem:[#allocation5 + $0x170] sm:$0xff]
    %v109 = vld [vmem:[#allocation5 + $0x178] sm:$0xff]
    %v110 = vld [vmem:[#allocation5 + $0x180] sm:$0xff]
    %v111 = vld [vmem:[#allocation5 + $0x188] sm:$0xff]
    %v112 = vld [vmem:[#allocation5 + $0x190] sm:$0xff]
    %v113 = vld [vmem:[#allocation5 + $0x198] sm:$0xff]
    %v114 = vld [vmem:[#allocation5 + $0x1a0] sm:$0xff]
    %v115 = vld [vmem:[#allocation5 + $0x1a8] sm:$0xff]
    %v116 = vld [vmem:[#allocation5 + $0x1b0] sm:$0xff]
    %v117 = vld [vmem:[#allocation5 + $0x1b8] sm:$0xff]
    %v118 = vld [vmem:[#allocation5 + $0x1c0] sm:$0xff]
    %v119 = vld [vmem:[#allocation5 + $0x1c8] sm:$0xff]
    %v120 = vld [vmem:[#allocation5 + $0x1d0] sm:$0xff]
    %v121 = vld [vmem:[#allocation5 + $0x1d8] sm:$0xff]
    %v122 = vld [vmem:[#allocation5 + $0x1e0] sm:$0xff]
    %v123 = vld [vmem:[#allocation5 + $0x1e8] sm:$0xff]
    %v124 = vld [vmem:[#allocation5 + $0x1f0] sm:$0xff]
    %v125 = vld [vmem:[#allocation5 + $0x1f8] sm:$0xff]
    %v126 = vld [vmem:[#allocation5 + $0x200] sm:$0xff]
    %v127 = vld [vmem:[#allocation5 + $0x208] sm:$0xff]
    %v128 = vld [vmem:[#allocation5 + $0x210] sm:$0xff]
    %v129 = vld [vmem:[#allocation5 + $0x218] sm:$0xff]
    %v130 = vld [vmem:[#allocation5 + $0x220] sm:$0xff]
    %v131 = vld [vmem:[#allocation5 + $0x228] sm:$0xff]
    %v132 = vld [vmem:[#allocation5 + $0x230] sm:$0xff]
    %v133 = vld [vmem:[#allocation5 + $0x238] sm:$0xff]
    %v134 = vld [vmem:[#allocation5 + $0x240] sm:$0xff]
    %v135 = vld [vmem:[#allocation5 + $0x248] sm:$0xff]
    %v136 = vld [vmem:[#allocation5 + $0x250] sm:$0xff]
    %v137 = vld [vmem:[#allocation5 + $0x258] sm:$0xff]
    %v138 = vld [vmem:[#allocation5 + $0x260] sm:$0xff]
    %v139 = vld [vmem:[#allocation5 + $0x268] sm:$0xff]
    %v140 = vld [vmem:[#allocation5 + $0x270] sm:$0xff]
    %v141 = vld [vmem:[#allocation5 + $0x278] sm:$0xff]
    %v142 = vld [vmem:[#allocation5 + $0x280] sm:$0xff]
    %v143 = vld [vmem:[#allocation5 + $0x288] sm:$0xff]
    %v144 = vld [vmem:[#allocation5 + $0x290] sm:$0xff]
    %v145 = vld [vmem:[#allocation5 + $0x298] sm:$0xff]
    %v146 = vld [vmem:[#allocation5 + $0x2a0] sm:$0xff]
    %v147 = vld [vmem:[#allocation5 + $0x2a8] sm:$0xff]
    %v148 = vld [vmem:[#allocation5 + $0x2b0] sm:$0xff]
    %v149 = vld [vmem:[#allocation5 + $0x2b8] sm:$0xff]
    %v150 = vld [vmem:[#allocation5 + $0x2c0] sm:$0xff]
    %v151 = vld [vmem:[#allocation5 + $0x2c8] sm:$0xff]
    %v152 = vld [vmem:[#allocation5 + $0x2d0] sm:$0xff]
    %v153 = vld [vmem:[#allocation5 + $0x2d8] sm:$0xff]
    %v154 = vld [vmem:[#allocation5 + $0x2e0] sm:$0xff]
    %v155 = vld [vmem:[#allocation5 + $0x2e8] sm:$0xff]
    %v156 = vld [vmem:[#allocation5 + $0x2f0] sm:$0xff]
    %v157 = vld [vmem:[#allocation5 + $0x2f8] sm:$0xff]
    %v158 = vld [vmem:[#allocation5 + $0x300] sm:$0xff]
    %v159 = vld [vmem:[#allocation5 + $0x308] sm:$0xff]
    %v160 = vld [vmem:[#allocation5 + $0x310] sm:$0xff]
    %v161 = vld [vmem:[#allocation5 + $0x318] sm:$0xff]
    %v162 = vld [vmem:[#allocation5 + $0x320] sm:$0xff]
    %v163 = vld [vmem:[#allocation5 + $0x328] sm:$0xff]
    %v164 = vld [vmem:[#allocation5 + $0x330] sm:$0xff]
    %v165 = vld [vmem:[#allocation5 + $0x338] sm:$0xff]
    %v166 = vld [vmem:[#allocation5 + $0x340] sm:$0xff]
    %v167 = vld [vmem:[#allocation5 + $0x348] sm:$0xff]
    %v168 = vld [vmem:[#allocation5 + $0x350] sm:$0xff]
    %v169 = vld [vmem:[#allocation5 + $0x358] sm:$0xff]
    %v170 = vld [vmem:[#allocation5 + $0x360] sm:$0xff]
    %v171 = vld [vmem:[#allocation5 + $0x368] sm:$0xff]
    %v172 = vld [vmem:[#allocation5 + $0x370] sm:$0xff]
    %v173 = vld [vmem:[#allocation5 + $0x378] sm:$0xff]
    %v174 = vld [vmem:[#allocation5 + $0x380] sm:$0xff]
    %v175 = vld [vmem:[#allocation5 + $0x388] sm:$0xff]
    %v176 = vld [vmem:[#allocation5 + $0x390] sm:$0xff]
    %v177 = vld [vmem:[#allocation5 + $0x398] sm:$0xff]
    %v178 = vld [vmem:[#allocation5 + $0x3a0] sm:$0xff]
    %v179 = vld [vmem:[#allocation5 + $0x3a8] sm:$0xff]
    %v180 = vld [vmem:[#allocation5 + $0x3b0] sm:$0xff]
    %v181 = vld [vmem:[#allocation5 + $0x3b8] sm:$0xff]
    %v182 = vld [vmem:[#allocation5 + $0x3c0] sm:$0xff]
    %v183 = vld [vmem:[#allocation5 + $0x3c8] sm:$0xff]
    %v184 = vld [vmem:[#allocation5 + $0x3d0] sm:$0xff]
    %v185 = vld [vmem:[#allocation5 + $0x3d8] sm:$0xff]
    %v186 = vld [vmem:[#allocation5 + $0x3e0] sm:$0xff]
    %v187 = vld [vmem:[#allocation5 + $0x3e8] sm:$0xff]
    %v188 = vld [vmem:[#allocation5 + $0x3f0] sm:$0xff]
    %v189 = vld [vmem:[#allocation5 + $0x3f8] sm:$0xff]
    %v190 = vld [vmem:[#allocation5 + $0x400] sm:$0xff]
    %v191 = vld [vmem:[#allocation5 + $0x408] sm:$0xff]
    %v192 = vld [vmem:[#allocation5 + $0x410] sm:$0xff]
    %v193 = vld [vmem:[#allocation5 + $0x418] sm:$0xff]
    %v194 = vld [vmem:[#allocation5 + $0x420] sm:$0xff]
    %v195 = vld [vmem:[#allocation5 + $0x428] sm:$0xff]
    %v196 = vld [vmem:[#allocation5 + $0x430] sm:$0xff]
    %v197 = vld [vmem:[#allocation5 + $0x438] sm:$0xff]
    %v198 = vld [vmem:[#allocation5 + $0x440] sm:$0xff]
    %v199 = vld [vmem:[#allocation5 + $0x448] sm:$0xff]
    %v200 = vld [vmem:[#allocation5 + $0x450] sm:$0xff]
    %v201 = vld [vmem:[#allocation5 + $0x458] sm:$0xff]
    %v202 = vld [vmem:[#allocation5 + $0x460] sm:$0xff]
    %v203 = vld [vmem:[#allocation5 + $0x468] sm:$0xff]
    %v204 = vld [vmem:[#allocation5 + $0x470] sm:$0xff]
    %v205 = vld [vmem:[#allocation5 + $0x478] sm:$0xff]
    %v206 = vld [vmem:[#allocation5 + $0x480] sm:$0xff]
    %v207 = vld [vmem:[#allocation5 + $0x488] sm:$0xff]
    %v208 = vld [vmem:[#allocation5 + $0x490] sm:$0xff]
    %v209 = vld [vmem:[#allocation5 + $0x498] sm:$0xff]
    %v210 = vld [vmem:[#allocation5 + $0x4a0] sm:$0xff]
    %v211 = vld [vmem:[#allocation5 + $0x4a8] sm:$0xff]
    %v212 = vld [vmem:[#allocation5 + $0x4b0] sm:$0xff]
    %v213 = vld [vmem:[#allocation5 + $0x4b8] sm:$0xff]
    %v214 = vld [vmem:[#allocation5 + $0x4c0] sm:$0xff]
    %v215 = vld [vmem:[#allocation5 + $0x4c8] sm:$0xff]
    %v216 = vld [vmem:[#allocation5 + $0x4d0] sm:$0xff]
    %v217 = vld [vmem:[#allocation5 + $0x4d8] sm:$0xff]
    %v218 = vld [vmem:[#allocation5 + $0x4e0] sm:$0xff]
    %v219 = vld [vmem:[#allocation5 + $0x4e8] sm:$0xff]
    %v220 = vld [vmem:[#allocation5 + $0x4f0] sm:$0xff]
    %v221 = vld [vmem:[#allocation5 + $0x4f8] sm:$0xff]
    %v222 = vld [vmem:[#allocation5 + $0x500] sm:$0xff]
    %v223 = vld [vmem:[#allocation5 + $0x508] sm:$0xff]
    %v224 = vld [vmem:[#allocation5 + $0x510] sm:$0xff]
    %v225 = vld [vmem:[#allocation5 + $0x518] sm:$0xff]
    %v226 = vld [vmem:[#allocation5 + $0x520] sm:$0xff]
    %v227 = vld [vmem:[#allocation5 + $0x528] sm:$0xff]
    %v228 = vld [vmem:[#allocation5 + $0x530] sm:$0xff]
    %v229 = vld [vmem:[#allocation5 + $0x538] sm:$0xff]
    %v230 = vld [vmem:[#allocation5 + $0x540] sm:$0xff]
    %v231 = vld [vmem:[#allocation5 + $0x548] sm:$0xff]
    %v232 = vld [vmem:[#allocation5 + $0x550] sm:$0xff]
    %v233 = vld [vmem:[#allocation5 + $0x558] sm:$0xff]
    %v234 = vld [vmem:[#allocation5 + $0x560] sm:$0xff]
    %v235 = vld [vmem:[#allocation5 + $0x568] sm:$0xff]
    %v236 = vld [vmem:[#allocation5 + $0x570] sm:$0xff]
    %v237 = vld [vmem:[#allocation5 + $0x578] sm:$0xff]
    %v238 = vld [vmem:[#allocation5 + $0x580] sm:$0xff]
    %v239 = vld [vmem:[#allocation5 + $0x588] sm:$0xff]
    %v240 = vld [vmem:[#allocation5 + $0x590] sm:$0xff]
    %v241 = vld [vmem:[#allocation5 + $0x598] sm:$0xff]
    %v242 = vld [vmem:[#allocation5 + $0x5a0] sm:$0xff]
    %v243 = vld [vmem:[#allocation5 + $0x5a8] sm:$0xff]
    %v244 = vld [vmem:[#allocation5 + $0x5b0] sm:$0xff]
    %v245 = vld [vmem:[#allocation5 + $0x5b8] sm:$0xff]
    %v246 = vld [vmem:[#allocation5 + $0x5c0] sm:$0xff]
    %v247 = vld [vmem:[#allocation5 + $0x5c8] sm:$0xff]
    %v248 = vld [vmem:[#allocation5 + $0x5d0] sm:$0xff]
    %v249 = vld [vmem:[#allocation5 + $0x5d8] sm:$0xff]
    %v250 = vld [vmem:[#allocation5 + $0x5e0] sm:$0xff]
    %v251 = vld [vmem:[#allocation5 + $0x5e8] sm:$0xff]
    %v252 = vld [vmem:[#allocation5 + $0x5f0] sm:$0xff]
    %v253 = vld [vmem:[#allocation5 + $0x5f8] sm:$0xff]
    %v254 = vld [vmem:[#allocation5 + $0x600] sm:$0xff]
    %v255 = vld [vmem:[#allocation5 + $0x608] sm:$0xff]
    %v256 = vld [vmem:[#allocation5 + $0x610] sm:$0xff]
    %v257 = vld [vmem:[#allocation5 + $0x618] sm:$0xff]
    %v258 = vld [vmem:[#allocation5 + $0x620] sm:$0xff]
    %v259 = vld [vmem:[#allocation5 + $0x628] sm:$0xff]
    %v260 = vld [vmem:[#allocation5 + $0x630] sm:$0xff]
    %v261 = vld [vmem:[#allocation5 + $0x638] sm:$0xff]
    %v262 = vld [vmem:[#allocation5 + $0x640] sm:$0xff]
    %v263 = vld [vmem:[#allocation5 + $0x648] sm:$0xff]
    %v264 = vld [vmem:[#allocation5 + $0x650] sm:$0xff]
    %v265 = vld [vmem:[#allocation5 + $0x658] sm:$0xff]
    %v266 = vld [vmem:[#allocation5 + $0x660] sm:$0xff]
    %v267 = vld [vmem:[#allocation5 + $0x668] sm:$0xff]
    %v268 = vld [vmem:[#allocation5 + $0x670] sm:$0xff]
    %v269 = vld [vmem:[#allocation5 + $0x678] sm:$0xff]
    %v270 = vld [vmem:[#allocation5 + $0x680] sm:$0xff]
    %v271 = vld [vmem:[#allocation5 + $0x688] sm:$0xff]
    %v272 = vld [vmem:[#allocation5 + $0x690] sm:$0xff]
    %v273 = vld [vmem:[#allocation5 + $0x698] sm:$0xff]
    %v274 = vld [vmem:[#allocation5 + $0x6a0] sm:$0xff]
    %v275 = vld [vmem:[#allocation5 + $0x6a8] sm:$0xff]
    %v276 = vld [vmem:[#allocation5 + $0x6b0] sm:$0xff]
    %v277 = vld [vmem:[#allocation5 + $0x6b8] sm:$0xff]
    %v278 = vld [vmem:[#allocation5 + $0x6c0] sm:$0xff]
    %v279 = vld [vmem:[#allocation5 + $0x6c8] sm:$0xff]
    %v280 = vld [vmem:[#allocation5 + $0x6d0] sm:$0xff]
    %v281 = vld [vmem:[#allocation5 + $0x6d8] sm:$0xff]
    %v282 = vld [vmem:[#allocation5 + $0x6e0] sm:$0xff]
    %v283 = vld [vmem:[#allocation5 + $0x6e8] sm:$0xff]
    %v284 = vld [vmem:[#allocation5 + $0x6f0] sm:$0xff]
    %v285 = vld [vmem:[#allocation5 + $0x6f8] sm:$0xff]
    %v286 = vld [vmem:[#allocation5 + $0x700] sm:$0xff]
    %v287 = vld [vmem:[#allocation5 + $0x708] sm:$0xff]
    %v288 = vld [vmem:[#allocation5 + $0x710] sm:$0xff]
    %v289 = vld [vmem:[#allocation5 + $0x718] sm:$0xff]
    %v290 = vld [vmem:[#allocation5 + $0x720] sm:$0xff]
    %v291 = vld [vmem:[#allocation5 + $0x728] sm:$0xff]
    %v292 = vld [vmem:[#allocation5 + $0x730] sm:$0xff]
    %v293 = vld [vmem:[#allocation5 + $0x738] sm:$0xff]
    %v294 = vld [vmem:[#allocation5 + $0x740] sm:$0xff]
    %v295 = vld [vmem:[#allocation5 + $0x748] sm:$0xff]
    %v296 = vld [vmem:[#allocation5 + $0x750] sm:$0xff]
    %v297 = vld [vmem:[#allocation5 + $0x758] sm:$0xff]
    %v298 = vld [vmem:[#allocation5 + $0x760] sm:$0xff]
    %v299 = vld [vmem:[#allocation5 + $0x768] sm:$0xff]
    %v300 = vld [vmem:[#allocation5 + $0x770] sm:$0xff]
    %v301 = vld [vmem:[#allocation5 + $0x778] sm:$0xff]
    %v302 = vld [vmem:[#allocation5 + $0x780] sm:$0xff]
    %v303 = vld [vmem:[#allocation5 + $0x788] sm:$0xff]
    %v304 = vld [vmem:[#allocation5 + $0x790] sm:$0xff]
    %v305 = vld [vmem:[#allocation5 + $0x798] sm:$0xff]
    %v306 = vld [vmem:[#allocation5 + $0x7a0] sm:$0xff]
    %v307 = vld [vmem:[#allocation5 + $0x7a8] sm:$0xff]
    %v308 = vld [vmem:[#allocation5 + $0x7b0] sm:$0xff]
    %v309 = vld [vmem:[#allocation5 + $0x7b8] sm:$0xff]
    %v310 = vld [vmem:[#allocation5 + $0x7c0] sm:$0xff]
    %v311 = vld [vmem:[#allocation5 + $0x7c8] sm:$0xff]
    %v312 = vld [vmem:[#allocation5 + $0x7d0] sm:$0xff]
    %v313 = vld [vmem:[#allocation5 + $0x7d8] sm:$0xff]
    %v314 = vld [vmem:[#allocation5 + $0x7e0] sm:$0xff]
    %v315 = vld [vmem:[#allocation5 + $0x7e8] sm:$0xff]
    %v316 = vld [vmem:[#allocation5 + $0x7f0] sm:$0xff]
    %v317 = vld [vmem:[#allocation5 + $0x7f8] sm:$0xff]
    %v318 = vld [vmem:[#allocation5 + $0x800] sm:$0xff]
    %v319 = vld [vmem:[#allocation5 + $0x808] sm:$0xff]
    %v320 = vld [vmem:[#allocation5 + $0x810] sm:$0xff]
    %v321 = vld [vmem:[#allocation5 + $0x818] sm:$0xff]
    %v322 = vld [vmem:[#allocation5 + $0x820] sm:$0xff]
    %v323 = vld [vmem:[#allocation5 + $0x828] sm:$0xff]
    %v324 = vld [vmem:[#allocation5 + $0x830] sm:$0xff]
    %v325 = vld [vmem:[#allocation5 + $0x838] sm:$0xff]
    %v326 = vld [vmem:[#allocation5 + $0x840] sm:$0xff]
    %v327 = vld [vmem:[#allocation5 + $0x848] sm:$0xff]
    %v328 = vld [vmem:[#allocation5 + $0x850] sm:$0xff]
    %v329 = vld [vmem:[#allocation5 + $0x858] sm:$0xff]
    %v330 = vld [vmem:[#allocation5 + $0x860] sm:$0xff]
    %v331 = vld [vmem:[#allocation5 + $0x868] sm:$0xff]
    %v332 = vld [vmem:[#allocation5 + $0x870] sm:$0xff]
    %v333 = vld [vmem:[#allocation5 + $0x878] sm:$0xff]
    %v334 = vld [vmem:[#allocation5 + $0x880] sm:$0xff]
    %v335 = vld [vmem:[#allocation5 + $0x888] sm:$0xff]
    %v336 = vld [vmem:[#allocation5 + $0x890] sm:$0xff]
    %v337 = vld [vmem:[#allocation5 + $0x898] sm:$0xff]
    %v338 = vld [vmem:[#allocation5 + $0x8a0] sm:$0xff]
    %v339 = vld [vmem:[#allocation5 + $0x8a8] sm:$0xff]
    %v340 = vld [vmem:[#allocation5 + $0x8b0] sm:$0xff]
    %v341 = vld [vmem:[#allocation5 + $0x8b8] sm:$0xff]
    %v342 = vld [vmem:[#allocation5 + $0x8c0] sm:$0xff]
    %v343 = vld [vmem:[#allocation5 + $0x8c8] sm:$0xff]
    %v344 = vld [vmem:[#allocation5 + $0x8d0] sm:$0xff]
    %v345 = vld [vmem:[#allocation5 + $0x8d8] sm:$0xff]
    %v346 = vld [vmem:[#allocation5 + $0x8e0] sm:$0xff]
    %v347 = vld [vmem:[#allocation5 + $0x8e8] sm:$0xff]
    %v348 = vld [vmem:[#allocation5 + $0x8f0] sm:$0xff]
    %v349 = vld [vmem:[#allocation5 + $0x8f8] sm:$0xff]
    %v350 = vld [vmem:[#allocation5 + $0x900] sm:$0xff]
    %v351 = vld [vmem:[#allocation5 + $0x908] sm:$0xff]
    %v352 = vld [vmem:[#allocation5 + $0x910] sm:$0xff]
    %v353 = vld [vmem:[#allocation5 + $0x918] sm:$0xff]
    %v354 = vld [vmem:[#allocation5 + $0x920] sm:$0xff]
    %v355 = vld [vmem:[#allocation5 + $0x928] sm:$0xff]
    %v356 = vld [vmem:[#allocation5 + $0x930] sm:$0xff]
    %v357 = vld [vmem:[#allocation5 + $0x938] sm:$0xff]
    %v358 = vld [vmem:[#allocation5 + $0x940] sm:$0xff]
    %v359 = vld [vmem:[#allocation5 + $0x948] sm:$0xff]
    %v360 = vld [vmem:[#allocation5 + $0x950] sm:$0xff]
    %v361 = vld [vmem:[#allocation5 + $0x958] sm:$0xff]
    %v362 = vld [vmem:[#allocation5 + $0x960] sm:$0xff]
    %v363 = vld [vmem:[#allocation5 + $0x968] sm:$0xff]
    %v364 = vld [vmem:[#allocation5 + $0x970] sm:$0xff]
    %v365 = vld [vmem:[#allocation5 + $0x978] sm:$0xff]
    %v366 = vld [vmem:[#allocation5 + $0x980] sm:$0xff]
    %v367 = vld [vmem:[#allocation5 + $0x988] sm:$0xff]
    %v368 = vld [vmem:[#allocation5 + $0x990] sm:$0xff]
    %v369 = vld [vmem:[#allocation5 + $0x998] sm:$0xff]
    %v370 = vld [vmem:[#allocation5 + $0x9a0] sm:$0xff]
    %v371 = vld [vmem:[#allocation5 + $0x9a8] sm:$0xff]
    %v372 = vld [vmem:[#allocation5 + $0x9b0] sm:$0xff]
    %v373 = vld [vmem:[#allocation5 + $0x9b8] sm:$0xff]
    %v374 = vld [vmem:[#allocation5 + $0x9c0] sm:$0xff]
    %v375 = vld [vmem:[#allocation5 + $0x9c8] sm:$0xff]
    %v376 = vld [vmem:[#allocation5 + $0x9d0] sm:$0xff]
    %v377 = vld [vmem:[#allocation5 + $0x9d8] sm:$0xff]
    %v378 = vld [vmem:[#allocation5 + $0x9e0] sm:$0xff]
    %v379 = vld [vmem:[#allocation5 + $0x9e8] sm:$0xff]
    %v380 = vld [vmem:[#allocation5 + $0x9f0] sm:$0xff]
    %v381 = vld [vmem:[#allocation5 + $0x9f8] sm:$0xff]
    %v382 = vld [vmem:[#allocation5 + $0xa00] sm:$0xff]
    %v383 = vld [vmem:[#allocation5 + $0xa08] sm:$0xff]
    %v384 = vld [vmem:[#allocation5 + $0xa10] sm:$0xff]
    %v385 = vld [vmem:[#allocation5 + $0xa18] sm:$0xff]
    %v386 = vld [vmem:[#allocation5 + $0xa20] sm:$0xff]
    %v387 = vld [vmem:[#allocation5 + $0xa28] sm:$0xff]
    %v388 = vld [vmem:[#allocation5 + $0xa30] sm:$0xff]
    %v389 = vld [vmem:[#allocation5 + $0xa38] sm:$0xff]
    %v390 = vld [vmem:[#allocation5 + $0xa40] sm:$0xff]
    %v391 = vld [vmem:[#allocation5 + $0xa48] sm:$0xff]
    %v392 = vld [vmem:[#allocation5 + $0xa50] sm:$0xff]
    %v393 = vld [vmem:[#allocation5 + $0xa58] sm:$0xff]
    %v394 = vld [vmem:[#allocation5 + $0xa60] sm:$0xff]
    %v395 = vld [vmem:[#allocation5 + $0xa68] sm:$0xff]
    %v396 = vld [vmem:[#allocation5 + $0xa70] sm:$0xff]
    %v397 = vld [vmem:[#allocation5 + $0xa78] sm:$0xff]
    %v398 = vld [vmem:[#allocation5 + $0xa80] sm:$0xff]
    %v399 = vld [vmem:[#allocation5 + $0xa88] sm:$0xff]
    %v400 = vld [vmem:[#allocation5 + $0xa90] sm:$0xff]
    %v401 = vld [vmem:[#allocation5 + $0xa98] sm:$0xff]
    %v402 = vld [vmem:[#allocation5 + $0xaa0] sm:$0xff]
    %v403 = vld [vmem:[#allocation5 + $0xaa8] sm:$0xff]
    %v404 = vld [vmem:[#allocation5 + $0xab0] sm:$0xff]
    %v405 = vld [vmem:[#allocation5 + $0xab8] sm:$0xff]
    %v406 = vld [vmem:[#allocation5 + $0xac0] sm:$0xff]
    %v407 = vld [vmem:[#allocation5 + $0xac8] sm:$0xff]
    %v408 = vld [vmem:[#allocation5 + $0xad0] sm:$0xff]
    %v409 = vld [vmem:[#allocation5 + $0xad8] sm:$0xff]
    %v410 = vld [vmem:[#allocation5 + $0xae0] sm:$0xff]
    %v411 = vld [vmem:[#allocation5 + $0xae8] sm:$0xff]
    %v412 = vld [vmem:[#allocation5 + $0xaf0] sm:$0xff]
    %v413 = vld [vmem:[#allocation5 + $0xaf8] sm:$0xff]
    %v414 = vld [vmem:[#allocation5 + $0xb00] sm:$0xff]
    %v415 = vld [vmem:[#allocation5 + $0xb08] sm:$0xff]
    %v416 = vld [vmem:[#allocation5 + $0xb10] sm:$0xff]
    %v417 = vld [vmem:[#allocation5 + $0xb18] sm:$0xff]
    %v418 = vld [vmem:[#allocation5 + $0xb20] sm:$0xff]
    %v419 = vld [vmem:[#allocation5 + $0xb28] sm:$0xff]
    %v420 = vld [vmem:[#allocation5 + $0xb30] sm:$0xff]
    %v421 = vld [vmem:[#allocation5 + $0xb38] sm:$0xff]
    %v422 = vld [vmem:[#allocation5 + $0xb40] sm:$0xff]
    %v423 = vld [vmem:[#allocation5 + $0xb48] sm:$0xff]
    %v424 = vld [vmem:[#allocation5 + $0xb50] sm:$0xff]
    %v425 = vld [vmem:[#allocation5 + $0xb58] sm:$0xff]
    %v426 = vld [vmem:[#allocation5 + $0xb60] sm:$0xff]
    %v427 = vld [vmem:[#allocation5 + $0xb68] sm:$0xff]
    %v428 = vld [vmem:[#allocation5 + $0xb70] sm:$0xff]
    %v429 = vld [vmem:[#allocation5 + $0xb78] sm:$0xff]
    %v430 = vld [vmem:[#allocation5 + $0xb80] sm:$0xff]
    %v431 = vld [vmem:[#allocation5 + $0xb88] sm:$0xff]
    %v432 = vld [vmem:[#allocation5 + $0xb90] sm:$0xff]
    %v433 = vld [vmem:[#allocation5 + $0xb98] sm:$0xff]
    %v434 = vld [vmem:[#allocation5 + $0xba0] sm:$0xff]
    %v435 = vld [vmem:[#allocation5 + $0xba8] sm:$0xff]
    %v436 = vld [vmem:[#allocation5 + $0xbb0] sm:$0xff]
    %v437 = vld [vmem:[#allocation5 + $0xbb8] sm:$0xff]
    %v438 = vld [vmem:[#allocation5 + $0xbc0] sm:$0xff]
    %v439 = vld [vmem:[#allocation5 + $0xbc8] sm:$0xff]
    %v440 = vld [vmem:[#allocation5 + $0xbd0] sm:$0xff]
    %v441 = vld [vmem:[#allocation5 + $0xbd8] sm:$0xff]
    %v442 = vld [vmem:[#allocation5 + $0xbe0] sm:$0xff]
    %v443 = vld [vmem:[#allocation5 + $0xbe8] sm:$0xff]
    %v444 = vld [vmem:[#allocation5 + $0xbf0] sm:$0xff]
    %v445 = vld [vmem:[#allocation5 + $0xbf8] sm:$0xff]
    %v446 = vld [vmem:[#allocation5 + $0xc00] sm:$0xff]
    %v447 = vld [vmem:[#allocation5 + $0xc08] sm:$0xff]
    %v448 = vld [vmem:[#allocation5 + $0xc10] sm:$0xff]
    %v449 = vld [vmem:[#allocation5 + $0xc18] sm:$0xff]
    %v450 = vld [vmem:[#allocation5 + $0xc20] sm:$0xff]
    %v451 = vld [vmem:[#allocation5 + $0xc28] sm:$0xff]
    %v452 = vld [vmem:[#allocation5 + $0xc30] sm:$0xff]
    %v453 = vld [vmem:[#allocation5 + $0xc38] sm:$0xff]
    %v454 = vld [vmem:[#allocation5 + $0xc40] sm:$0xff]
    %v455 = vld [vmem:[#allocation5 + $0xc48] sm:$0xff]
    %v456 = vld [vmem:[#allocation5 + $0xc50] sm:$0xff]
    %v457 = vld [vmem:[#allocation5 + $0xc58] sm:$0xff]
    %v458 = vld [vmem:[#allocation5 + $0xc60] sm:$0xff]
    %v459 = vld [vmem:[#allocation5 + $0xc68] sm:$0xff]
    %v460 = vld [vmem:[#allocation5 + $0xc70] sm:$0xff]
    %v461 = vld [vmem:[#allocation5 + $0xc78] sm:$0xff]
    %v462 = vld [vmem:[#allocation5 + $0xc80] sm:$0xff]
    %v463 = vld [vmem:[#allocation5 + $0xc88] sm:$0xff]
    %v464 = vld [vmem:[#allocation5 + $0xc90] sm:$0xff]
    %v465 = vld [vmem:[#allocation5 + $0xc98] sm:$0xff]
    %v466 = vld [vmem:[#allocation5 + $0xca0] sm:$0xff]
    %v467 = vld [vmem:[#allocation5 + $0xca8] sm:$0xff]
    %v468 = vld [vmem:[#allocation5 + $0xcb0] sm:$0xff]
    %v469 = vld [vmem:[#allocation5 + $0xcb8] sm:$0xff]
    %v470 = vld [vmem:[#allocation5 + $0xcc0] sm:$0xff]
    %v471 = vld [vmem:[#allocation5 + $0xcc8] sm:$0xff]
    %v472 = vld [vmem:[#allocation5 + $0xcd0] sm:$0xff]
    %v473 = vld [vmem:[#allocation5 + $0xcd8] sm:$0xff]
    %v474 = vld [vmem:[#allocation5 + $0xce0] sm:$0xff]
    %v475 = vld [vmem:[#allocation5 + $0xce8] sm:$0xff]
    %v476 = vld [vmem:[#allocation5 + $0xcf0] sm:$0xff]
    %v477 = vld [vmem:[#allocation5 + $0xcf8] sm:$0xff]
    %v478 = vld [vmem:[#allocation5 + $0xd00] sm:$0xff]
    %v479 = vld [vmem:[#allocation5 + $0xd08] sm:$0xff]
    %v480 = vld [vmem:[#allocation5 + $0xd10] sm:$0xff]
    %v481 = vld [vmem:[#allocation5 + $0xd18] sm:$0xff]
    %v482 = vld [vmem:[#allocation5 + $0xd20] sm:$0xff]
    %v483 = vld [vmem:[#allocation5 + $0xd28] sm:$0xff]
    %v484 = vld [vmem:[#allocation5 + $0xd30] sm:$0xff]
    %v485 = vld [vmem:[#allocation5 + $0xd38] sm:$0xff]
    %v486 = vld [vmem:[#allocation5 + $0xd40] sm:$0xff]
    %v487 = vld [vmem:[#allocation5 + $0xd48] sm:$0xff]
    %v488 = vld [vmem:[#allocation5 + $0xd50] sm:$0xff]
    %v489 = vld [vmem:[#allocation5 + $0xd58] sm:$0xff]
    %v490 = vld [vmem:[#allocation5 + $0xd60] sm:$0xff]
    %v491 = vld [vmem:[#allocation5 + $0xd68] sm:$0xff]
    %v492 = vld [vmem:[#allocation5 + $0xd70] sm:$0xff]
    %v493 = vld [vmem:[#allocation5 + $0xd78] sm:$0xff]
    %v494 = vld [vmem:[#allocation5 + $0xd80] sm:$0xff]
    %v495 = vld [vmem:[#allocation5 + $0xd88] sm:$0xff]
    %v496 = vld [vmem:[#allocation5 + $0xd90] sm:$0xff]
    %v497 = vld [vmem:[#allocation5 + $0xd98] sm:$0xff]
    %v498 = vld [vmem:[#allocation5 + $0xda0] sm:$0xff]
    %v499 = vld [vmem:[#allocation5 + $0xda8] sm:$0xff]
    %v500 = vld [vmem:[#allocation5 + $0xdb0] sm:$0xff]
    %v501 = vld [vmem:[#allocation5 + $0xdb8] sm:$0xff]
    %v502 = vld [vmem:[#allocation5 + $0xdc0] sm:$0xff]
    %v503 = vld [vmem:[#allocation5 + $0xdc8] sm:$0xff]
    %v504 = vld [vmem:[#allocation5 + $0xdd0] sm:$0xff]
    %v505 = vld [vmem:[#allocation5 + $0xdd8] sm:$0xff]
    %v506 = vld [vmem:[#allocation5 + $0xde0] sm:$0xff]
    %v507 = vld [vmem:[#allocation5 + $0xde8] sm:$0xff]
    %v508 = vld [vmem:[#allocation5 + $0xdf0] sm:$0xff]
    %v509 = vld [vmem:[#allocation5 + $0xdf8] sm:$0xff]
    %v510 = vld [vmem:[#allocation5 + $0xe00] sm:$0xff]
    %v511 = vld [vmem:[#allocation5 + $0xe08] sm:$0xff]
    %v512 = vld [vmem:[#allocation5 + $0xe10] sm:$0xff]
    %v513 = vld [vmem:[#allocation5 + $0xe18] sm:$0xff]
    %v514 = vld [vmem:[#allocation5 + $0xe20] sm:$0xff]
    %v515 = vld [vmem:[#allocation5 + $0xe28] sm:$0xff]
    %v516 = vld [vmem:[#allocation5 + $0xe30] sm:$0xff]
    %v517 = vld [vmem:[#allocation5 + $0xe38] sm:$0xff]
    %v518 = vld [vmem:[#allocation5 + $0xe40] sm:$0xff]
    %v519 = vld [vmem:[#allocation5 + $0xe48] sm:$0xff]
    %v520 = vld [vmem:[#allocation5 + $0xe50] sm:$0xff]
    %v521 = vld [vmem:[#allocation5 + $0xe58] sm:$0xff]
    %v522 = vld [vmem:[#allocation5 + $0xe60] sm:$0xff]
    %v523 = vld [vmem:[#allocation5 + $0xe68] sm:$0xff]
    %v524 = vld [vmem:[#allocation5 + $0xe70] sm:$0xff]
    %v525 = vld [vmem:[#allocation5 + $0xe78] sm:$0xff]
    %v526 = vld [vmem:[#allocation5 + $0xe80] sm:$0xff]
    %v527 = vld [vmem:[#allocation5 + $0xe88] sm:$0xff]
    %v528 = vld [vmem:[#allocation5 + $0xe90] sm:$0xff]
    %v529 = vld [vmem:[#allocation5 + $0xe98] sm:$0xff]
    %v530 = vld [vmem:[#allocation5 + $0xea0] sm:$0xff]
    %v531 = vld [vmem:[#allocation5 + $0xea8] sm:$0xff]
    %v532 = vld [vmem:[#allocation5 + $0xeb0] sm:$0xff]
    %v533 = vld [vmem:[#allocation5 + $0xeb8] sm:$0xff]
    %v534 = vld [vmem:[#allocation5 + $0xec0] sm:$0xff]
    %v535 = vld [vmem:[#allocation5 + $0xec8] sm:$0xff]
    %v536 = vld [vmem:[#allocation5 + $0xed0] sm:$0xff]
    %v537 = vld [vmem:[#allocation5 + $0xed8] sm:$0xff]
    %v538 = vld [vmem:[#allocation5 + $0xee0] sm:$0xff]
    %v539 = vld [vmem:[#allocation5 + $0xee8] sm:$0xff]
    %v540 = vld [vmem:[#allocation5 + $0xef0] sm:$0xff]
    %v541 = vld [vmem:[#allocation5 + $0xef8] sm:$0xff]
    %v542 = vld [vmem:[#allocation5 + $0xf00] sm:$0xff]
    %v543 = vld [vmem:[#allocation5 + $0xf08] sm:$0xff]
    %v544 = vld [vmem:[#allocation5 + $0xf10] sm:$0xff]
    %v545 = vld [vmem:[#allocation5 + $0xf18] sm:$0xff]
    %v546 = vld [vmem:[#allocation5 + $0xf20] sm:$0xff]
    %v547 = vld [vmem:[#allocation5 + $0xf28] sm:$0xff]
    %v548 = vld [vmem:[#allocation5 + $0xf30] sm:$0xff]
    %v549 = vld [vmem:[#allocation5 + $0xf38] sm:$0xff]
    %v550 = vld [vmem:[#allocation5 + $0xf40] sm:$0xff]
    %v551 = vld [vmem:[#allocation5 + $0xf48] sm:$0xff]
    %v552 = vld [vmem:[#allocation5 + $0xf50] sm:$0xff]
    %v553 = vld [vmem:[#allocation5 + $0xf58] sm:$0xff]
    %v554 = vld [vmem:[#allocation5 + $0xf60] sm:$0xff]
    %v555 = vld [vmem:[#allocation5 + $0xf68] sm:$0xff]
    %v556 = vld [vmem:[#allocation5 + $0xf70] sm:$0xff]
    %v557 = vld [vmem:[#allocation5 + $0xf78] sm:$0xff]
    %v558 = vld [vmem:[#allocation5 + $0xf80] sm:$0xff]
    %v559 = vld [vmem:[#allocation5 + $0xf88] sm:$0xff]
    %v560 = vld [vmem:[#allocation5 + $0xf90] sm:$0xff]
    %v561 = vld [vmem:[#allocation5 + $0xf98] sm:$0xff]
    %v562 = vld [vmem:[#allocation5 + $0xfa0] sm:$0xff]
    %v563 = vld [vmem:[#allocation5 + $0xfa8] sm:$0xff]
    %v564 = vld [vmem:[#allocation5 + $0xfb0] sm:$0xff]
    %v565 = vld [vmem:[#allocation5 + $0xfb8] sm:$0xff]
    %v566 = vld [vmem:[#allocation5 + $0xfc0] sm:$0xff]
    %v567 = vld [vmem:[#allocation5 + $0xfc8] sm:$0xff]
    %v568 = vld [vmem:[#allocation5 + $0xfd0] sm:$0xff]
    %v569 = vld [vmem:[#allocation5 + $0xfd8] sm:$0xff]
    %v570 = vld [vmem:[#allocation5 + $0xfe0] sm:$0xff]
    %v571 = vld [vmem:[#allocation5 + $0xfe8] sm:$0xff]
    %v572 = vld [vmem:[#allocation5 + $0xff0] sm:$0xff]
    %v573 = vld [vmem:[#allocation5 + $0xff8] sm:$0xff]
    %v574 = vld [vmem:[#allocation5 + $0x1000] sm:$0xff]
    %v575 = vld [vmem:[#allocation5 + $0x1008] sm:$0xff]
    %v576 = vld [vmem:[#allocation5 + $0x1010] sm:$0xff]
    %v577 = vld [vmem:[#allocation5 + $0x1018] sm:$0xff]
    %v578 = vld [vmem:[#allocation5 + $0x1020] sm:$0xff]
    %v579 = vld [vmem:[#allocation5 + $0x1028] sm:$0xff]
    %v580 = vld [vmem:[#allocation5 + $0x1030] sm:$0xff]
    %v581 = vld [vmem:[#allocation5 + $0x1038] sm:$0xff]
    %v582 = vld [vmem:[#allocation5 + $0x1040] sm:$0xff]
    %v583 = vld [vmem:[#allocation5 + $0x1048] sm:$0xff]
    %v584 = vld [vmem:[#allocation5 + $0x1050] sm:$0xff]
    %v585 = vld [vmem:[#allocation5 + $0x1058] sm:$0xff]
    %v586 = vld [vmem:[#allocation5 + $0x1060] sm:$0xff]
    %v587 = vld [vmem:[#allocation5 + $0x1068] sm:$0xff]
    %v588 = vld [vmem:[#allocation5 + $0x1070] sm:$0xff]
    %v589 = vld [vmem:[#allocation5 + $0x1078] sm:$0xff]
    %v590 = vld [vmem:[#allocation5 + $0x1080] sm:$0xff]
    %v591 = vld [vmem:[#allocation5 + $0x1088] sm:$0xff]
    %v592 = vld [vmem:[#allocation5 + $0x1090] sm:$0xff]
    %v593 = vld [vmem:[#allocation5 + $0x1098] sm:$0xff]
    %v594 = vld [vmem:[#allocation5 + $0x10a0] sm:$0xff]
    %v595 = vld [vmem:[#allocation5 + $0x10a8] sm:$0xff]
    %v596 = vld [vmem:[#allocation5 + $0x10b0] sm:$0xff]
    %v597 = vld [vmem:[#allocation5 + $0x10b8] sm:$0xff]
    %v598 = vld [vmem:[#allocation5 + $0x10c0] sm:$0xff]
    %v599 = vld [vmem:[#allocation5 + $0x10c8] sm:$0xff]
    %v600 = vld [vmem:[#allocation5 + $0x10d0] sm:$0xff]
    %v601 = vld [vmem:[#allocation5 + $0x10d8] sm:$0xff]
    %v602 = vld [vmem:[#allocation5 + $0x10e0] sm:$0xff]
    %v603 = vld [vmem:[#allocation5 + $0x10e8] sm:$0xff]
    %v604 = vld [vmem:[#allocation5 + $0x10f0] sm:$0xff]
    %v605 = vld [vmem:[#allocation5 + $0x10f8] sm:$0xff]
    %v606 = vld [vmem:[#allocation5 + $0x1100] sm:$0xff]
    %v607 = vld [vmem:[#allocation5 + $0x1108] sm:$0xff]
    %v608 = vld [vmem:[#allocation5 + $0x1110] sm:$0xff]
    %v609 = vld [vmem:[#allocation5 + $0x1118] sm:$0xff]
    %v610 = vld [vmem:[#allocation5 + $0x1120] sm:$0xff]
    %v611 = vld [vmem:[#allocation5 + $0x1128] sm:$0xff]
    %v612 = vld [vmem:[#allocation5 + $0x1130] sm:$0xff]
    %v613 = vld [vmem:[#allocation5 + $0x1138] sm:$0xff]
    %v614 = vld [vmem:[#allocation5 + $0x1140] sm:$0xff]
    %v615 = vld [vmem:[#allocation5 + $0x1148] sm:$0xff]
    %v616 = vld [vmem:[#allocation5 + $0x1150] sm:$0xff]
    %v617 = vld [vmem:[#allocation5 + $0x1158] sm:$0xff]
    %v618 = vld [vmem:[#allocation5 + $0x1160] sm:$0xff]
    %v619 = vld [vmem:[#allocation5 + $0x1168] sm:$0xff]
    %v620 = vld [vmem:[#allocation5 + $0x1170] sm:$0xff]
    %v621 = vld [vmem:[#allocation5 + $0x1178] sm:$0xff]
    %v622 = vld [vmem:[#allocation5 + $0x1180] sm:$0xff]
    %v623 = vld [vmem:[#allocation5 + $0x1188] sm:$0xff]
    %v624 = vld [vmem:[#allocation5 + $0x1190] sm:$0xff]
    %v625 = vld [vmem:[#allocation5 + $0x1198] sm:$0xff]
    %v626 = vld [vmem:[#allocation5 + $0x11a0] sm:$0xff]
    %v627 = vld [vmem:[#allocation5 + $0x11a8] sm:$0xff]
    %v628 = vld [vmem:[#allocation5 + $0x11b0] sm:$0xff]
    %v629 = vld [vmem:[#allocation5 + $0x11b8] sm:$0xff]
    %v630 = vld [vmem:[#allocation5 + $0x11c0] sm:$0xff]
    %v631 = vld [vmem:[#allocation5 + $0x11c8] sm:$0xff]
    %v632 = vld [vmem:[#allocation5 + $0x11d0] sm:$0xff]
    %v633 = vld [vmem:[#allocation5 + $0x11d8] sm:$0xff]
    %v634 = vld [vmem:[#allocation5 + $0x11e0] sm:$0xff]
    %v635 = vld [vmem:[#allocation5 + $0x11e8] sm:$0xff]
    %v636 = vld [vmem:[#allocation5 + $0x11f0] sm:$0xff]
    %v637 = vld [vmem:[#allocation5 + $0x11f8] sm:$0xff]
    %v638 = vld [vmem:[#allocation5 + $0x1200] sm:$0xff]
    %v639 = vld [vmem:[#allocation5 + $0x1208] sm:$0xff]
    %v640 = vld [vmem:[#allocation5 + $0x1210] sm:$0xff]
    %v641 = vld [vmem:[#allocation5 + $0x1218] sm:$0xff]
    %v642 = vld [vmem:[#allocation5 + $0x1220] sm:$0xff]
    %v643 = vld [vmem:[#allocation5 + $0x1228] sm:$0xff]
    %v644 = vld [vmem:[#allocation5 + $0x1230] sm:$0xff]
    %v645 = vld [vmem:[#allocation5 + $0x1238] sm:$0xff]
    %v646 = vld [vmem:[#allocation5 + $0x1240] sm:$0xff]
    %v647 = vld [vmem:[#allocation5 + $0x1248] sm:$0xff]
    %v648 = vld [vmem:[#allocation5 + $0x1250] sm:$0xff]
    %v649 = vld [vmem:[#allocation5 + $0x1258] sm:$0xff]
    %v650 = vld [vmem:[#allocation5 + $0x1260] sm:$0xff]
    %v651 = vld [vmem:[#allocation5 + $0x1268] sm:$0xff]
    %v652 = vld [vmem:[#allocation5 + $0x1270] sm:$0xff]
    %v653 = vld [vmem:[#allocation5 + $0x1278] sm:$0xff]
    %v654 = vld [vmem:[#allocation5 + $0x1280] sm:$0xff]
    %v655 = vld [vmem:[#allocation5 + $0x1288] sm:$0xff]
    %v656 = vld [vmem:[#allocation5 + $0x1290] sm:$0xff]
    %v657 = vld [vmem:[#allocation5 + $0x1298] sm:$0xff]
    %v658 = vld [vmem:[#allocation5 + $0x12a0] sm:$0xff]
    %v659 = vld [vmem:[#allocation5 + $0x12a8] sm:$0xff]
    %v660 = vld [vmem:[#allocation5 + $0x12b0] sm:$0xff]
    %v661 = vld [vmem:[#allocation5 + $0x12b8] sm:$0xff]
    %v662 = vld [vmem:[#allocation5 + $0x12c0] sm:$0xff]
    %v663 = vld [vmem:[#allocation5 + $0x12c8] sm:$0xff]
    %v664 = vld [vmem:[#allocation5 + $0x12d0] sm:$0xff]
    %v665 = vld [vmem:[#allocation5 + $0x12d8] sm:$0xff]
    %v666 = vld [vmem:[#allocation5 + $0x12e0] sm:$0xff]
    %v667 = vld [vmem:[#allocation5 + $0x12e8] sm:$0xff]
    %v668 = vld [vmem:[#allocation5 + $0x12f0] sm:$0xff]
    %v669 = vld [vmem:[#allocation5 + $0x12f8] sm:$0xff]
    %v670 = vld [vmem:[#allocation5 + $0x1300] sm:$0xff]
    %v671 = vld [vmem:[#allocation5 + $0x1308] sm:$0xff]
    %v672 = vld [vmem:[#allocation5 + $0x1310] sm:$0xff]
    %v673 = vld [vmem:[#allocation5 + $0x1318] sm:$0xff]
    %v674 = vld [vmem:[#allocation5 + $0x1320] sm:$0xff]
    %v675 = vld [vmem:[#allocation5 + $0x1328] sm:$0xff]
    %v676 = vld [vmem:[#allocation5 + $0x1330] sm:$0xff]
    %v677 = vld [vmem:[#allocation5 + $0x1338] sm:$0xff]
    %v678 = vld [vmem:[#allocation5 + $0x1340] sm:$0xff]
    %v679 = vld [vmem:[#allocation5 + $0x1348] sm:$0xff]
    %v680 = vld [vmem:[#allocation5 + $0x1350] sm:$0xff]
    %v681 = vld [vmem:[#allocation5 + $0x1358] sm:$0xff]
    %v682 = vld [vmem:[#allocation5 + $0x1360] sm:$0xff]
    %v683 = vld [vmem:[#allocation5 + $0x1368] sm:$0xff]
    %v684 = vld [vmem:[#allocation5 + $0x1370] sm:$0xff]
    %v685 = vld [vmem:[#allocation5 + $0x1378] sm:$0xff]
    %v686 = vld [vmem:[#allocation5 + $0x1380] sm:$0xff]
    %v687 = vld [vmem:[#allocation5 + $0x1388] sm:$0xff]
    %v688 = vld [vmem:[#allocation5 + $0x1390] sm:$0xff]
    %v689 = vld [vmem:[#allocation5 + $0x1398] sm:$0xff]
    %v690 = vld [vmem:[#allocation5 + $0x13a0] sm:$0xff]
    %v691 = vld [vmem:[#allocation5 + $0x13a8] sm:$0xff]
    %v692 = vld [vmem:[#allocation5 + $0x13b0] sm:$0xff]
    %v693 = vld [vmem:[#allocation5 + $0x13b8] sm:$0xff]
    %v694 = vld [vmem:[#allocation5 + $0x13c0] sm:$0xff]
    %v695 = vld [vmem:[#allocation5 + $0x13c8] sm:$0xff]
    %v696 = vld [vmem:[#allocation5 + $0x13d0] sm:$0xff]
    %v697 = vld [vmem:[#allocation5 + $0x13d8] sm:$0xff]
    %v698 = vld [vmem:[#allocation5 + $0x13e0] sm:$0xff]
    %v699 = vld [vmem:[#allocation5 + $0x13e8] sm:$0xff]
    %v700 = vld [vmem:[#allocation5 + $0x13f0] sm:$0xff]
    %v701 = vld [vmem:[#allocation5 + $0x13f8] sm:$0xff]
    %v702 = vld [vmem:[#allocation5 + $0x1400] sm:$0xff]
    %v703 = vld [vmem:[#allocation5 + $0x1408] sm:$0xff]
    %v704 = vld [vmem:[#allocation5 + $0x1410] sm:$0xff]
    %v705 = vld [vmem:[#allocation5 + $0x1418] sm:$0xff]
    %v706 = vld [vmem:[#allocation5 + $0x1420] sm:$0xff]
    %v707 = vld [vmem:[#allocation5 + $0x1428] sm:$0xff]
    %v708 = vld [vmem:[#allocation5 + $0x1430] sm:$0xff]
    %v709 = vld [vmem:[#allocation5 + $0x1438] sm:$0xff]
    %v710 = vld [vmem:[#allocation5 + $0x1440] sm:$0xff]
    %v711 = vld [vmem:[#allocation5 + $0x1448] sm:$0xff]
    %v712 = vld [vmem:[#allocation5 + $0x1450] sm:$0xff]
    %v713 = vld [vmem:[#allocation5 + $0x1458] sm:$0xff]
    %v714 = vld [vmem:[#allocation5 + $0x1460] sm:$0xff]
    %v715 = vld [vmem:[#allocation5 + $0x1468] sm:$0xff]
    %v716 = vld [vmem:[#allocation5 + $0x1470] sm:$0xff]
    %v717 = vld [vmem:[#allocation5 + $0x1478] sm:$0xff]
    %v718 = vld [vmem:[#allocation5 + $0x1480] sm:$0xff]
    %v719 = vld [vmem:[#allocation5 + $0x1488] sm:$0xff]
    %v720 = vld [vmem:[#allocation5 + $0x1490] sm:$0xff]
    %v721 = vld [vmem:[#allocation5 + $0x1498] sm:$0xff]
    %v722 = vld [vmem:[#allocation5 + $0x14a0] sm:$0xff]
    %v723 = vld [vmem:[#allocation5 + $0x14a8] sm:$0xff]
    %v724 = vld [vmem:[#allocation5 + $0x14b0] sm:$0xff]
    %v725 = vld [vmem:[#allocation5 + $0x14b8] sm:$0xff]
    %v726 = vld [vmem:[#allocation5 + $0x14c0] sm:$0xff]
    %v727 = vld [vmem:[#allocation5 + $0x14c8] sm:$0xff]
    %v728 = vld [vmem:[#allocation5 + $0x14d0] sm:$0xff]
    %v729 = vld [vmem:[#allocation5 + $0x14d8] sm:$0xff]
    %v730 = vld [vmem:[#allocation5 + $0x14e0] sm:$0xff]
    %v731 = vld [vmem:[#allocation5 + $0x14e8] sm:$0xff]
    %v732 = vld [vmem:[#allocation5 + $0x14f0] sm:$0xff]
    %v733 = vld [vmem:[#allocation5 + $0x14f8] sm:$0xff]
    %v734 = vld [vmem:[#allocation5 + $0x1500] sm:$0xff]
    %v735 = vld [vmem:[#allocation5 + $0x1508] sm:$0xff]
    %v736 = vld [vmem:[#allocation5 + $0x1510] sm:$0xff]
    %v737 = vld [vmem:[#allocation5 + $0x1518] sm:$0xff]
    %v738 = vld [vmem:[#allocation5 + $0x1520] sm:$0xff]
    %v739 = vld [vmem:[#allocation5 + $0x1528] sm:$0xff]
    %v740 = vld [vmem:[#allocation5 + $0x1530] sm:$0xff]
    %v741 = vld [vmem:[#allocation5 + $0x1538] sm:$0xff]
    %v742 = vld [vmem:[#allocation5 + $0x1540] sm:$0xff]
    %v743 = vld [vmem:[#allocation5 + $0x1548] sm:$0xff]
    %v744 = vld [vmem:[#allocation5 + $0x1550] sm:$0xff]
    %v745 = vld [vmem:[#allocation5 + $0x1558] sm:$0xff]
    %v746 = vld [vmem:[#allocation5 + $0x1560] sm:$0xff]
    %v747 = vld [vmem:[#allocation5 + $0x1568] sm:$0xff]
    %v748 = vld [vmem:[#allocation5 + $0x1570] sm:$0xff]
    %v749 = vld [vmem:[#allocation5 + $0x1578] sm:$0xff]
    %v750 = vld [vmem:[#allocation5 + $0x1580] sm:$0xff]
    %v751 = vld [vmem:[#allocation5 + $0x1588] sm:$0xff]
    %v752 = vld [vmem:[#allocation5 + $0x1590] sm:$0xff]
    %v753 = vld [vmem:[#allocation5 + $0x1598] sm:$0xff]
    %v754 = vld [vmem:[#allocation5 + $0x15a0] sm:$0xff]
    %v755 = vld [vmem:[#allocation5 + $0x15a8] sm:$0xff]
    %v756 = vld [vmem:[#allocation5 + $0x15b0] sm:$0xff]
    %v757 = vld [vmem:[#allocation5 + $0x15b8] sm:$0xff]
    %v758 = vld [vmem:[#allocation5 + $0x15c0] sm:$0xff]
    %v759 = vld [vmem:[#allocation5 + $0x15c8] sm:$0xff]
    %v760 = vld [vmem:[#allocation5 + $0x15d0] sm:$0xff]
    %v761 = vld [vmem:[#allocation5 + $0x15d8] sm:$0xff]
    %v762 = vld [vmem:[#allocation5 + $0x15e0] sm:$0xff]
    %v763 = vld [vmem:[#allocation5 + $0x15e8] sm:$0xff]
    %v764 = vld [vmem:[#allocation5 + $0x15f0] sm:$0xff]
    %v765 = vld [vmem:[#allocation5 + $0x15f8] sm:$0xff]
    %v766 = vld [vmem:[#allocation5 + $0x1600] sm:$0xff]
    %v767 = vld [vmem:[#allocation5 + $0x1608] sm:$0xff]
    %v768 = vld [vmem:[#allocation5 + $0x1610] sm:$0xff]
    %v769 = vld [vmem:[#allocation5 + $0x1618] sm:$0xff]
    %v770 = vld [vmem:[#allocation5 + $0x1620] sm:$0xff]
    %v771 = vld [vmem:[#allocation5 + $0x1628] sm:$0xff]
    %v772 = vld [vmem:[#allocation5 + $0x1630] sm:$0xff]
    %v773 = vld [vmem:[#allocation5 + $0x1638] sm:$0xff]
    %v774 = vld [vmem:[#allocation5 + $0x1640] sm:$0xff]
    %v775 = vld [vmem:[#allocation5 + $0x1648] sm:$0xff]
    %v776 = vld [vmem:[#allocation5 + $0x1650] sm:$0xff]
    %v777 = vld [vmem:[#allocation5 + $0x1658] sm:$0xff]
    %v778 = vld [vmem:[#allocation5 + $0x1660] sm:$0xff]
    %v779 = vld [vmem:[#allocation5 + $0x1668] sm:$0xff]
    %v780 = vld [vmem:[#allocation5 + $0x1670] sm:$0xff]
    %v781 = vld [vmem:[#allocation5 + $0x1678] sm:$0xff]
    %v782 = vld [vmem:[#allocation5 + $0x1680] sm:$0xff]
    %v783 = vld [vmem:[#allocation5 + $0x1688] sm:$0xff]
    %v784 = vld [vmem:[#allocation5 + $0x1690] sm:$0xff]
    %v785 = vld [vmem:[#allocation5 + $0x1698] sm:$0xff]
    %v786 = vld [vmem:[#allocation5 + $0x16a0] sm:$0xff]
    %v787 = vld [vmem:[#allocation5 + $0x16a8] sm:$0xff]
    %v788 = vld [vmem:[#allocation5 + $0x16b0] sm:$0xff]
    %v789 = vld [vmem:[#allocation5 + $0x16b8] sm:$0xff]
    %v790 = vld [vmem:[#allocation5 + $0x16c0] sm:$0xff]
    %v791 = vld [vmem:[#allocation5 + $0x16c8] sm:$0xff]
    %v792 = vld [vmem:[#allocation5 + $0x16d0] sm:$0xff]
    %v793 = vld [vmem:[#allocation5 + $0x16d8] sm:$0xff]
    %v794 = vld [vmem:[#allocation5 + $0x16e0] sm:$0xff]
    %v795 = vld [vmem:[#allocation5 + $0x16e8] sm:$0xff]
    %v796 = vld [vmem:[#allocation5 + $0x16f0] sm:$0xff]
    %v797 = vld [vmem:[#allocation5 + $0x16f8] sm:$0xff]
    %v798 = vld [vmem:[#allocation5 + $0x1700] sm:$0xff]
    %v799 = vld [vmem:[#allocation5 + $0x1708] sm:$0xff]
    %v800 = vld [vmem:[#allocation5 + $0x1710] sm:$0xff]
    %v801 = vld [vmem:[#allocation5 + $0x1718] sm:$0xff]
    %v802 = vld [vmem:[#allocation5 + $0x1720] sm:$0xff]
    %v803 = vld [vmem:[#allocation5 + $0x1728] sm:$0xff]
    %v804 = vld [vmem:[#allocation5 + $0x1730] sm:$0xff]
    %v805 = vld [vmem:[#allocation5 + $0x1738] sm:$0xff]
    %v806 = vld [vmem:[#allocation5 + $0x1740] sm:$0xff]
    %v807 = vld [vmem:[#allocation5 + $0x1748] sm:$0xff]
    %v808 = vld [vmem:[#allocation5 + $0x1750] sm:$0xff]
    %v809 = vld [vmem:[#allocation5 + $0x1758] sm:$0xff]
    %v810 = vld [vmem:[#allocation5 + $0x1760] sm:$0xff]
    %v811 = vld [vmem:[#allocation5 + $0x1768] sm:$0xff]
    %v812 = vld [vmem:[#allocation5 + $0x1770] sm:$0xff]
    %v813 = vld [vmem:[#allocation5 + $0x1778] sm:$0xff]
    %v814 = vld [vmem:[#allocation5 + $0x1780] sm:$0xff]
    %v815 = vld [vmem:[#allocation5 + $0x1788] sm:$0xff]
    %v816 = vld [vmem:[#allocation5 + $0x1790] sm:$0xff]
    %v817 = vld [vmem:[#allocation5 + $0x1798] sm:$0xff]
    %v818 = vld [vmem:[#allocation5 + $0x17a0] sm:$0xff]
    %v819 = vld [vmem:[#allocation5 + $0x17a8] sm:$0xff]
    %v820 = vld [vmem:[#allocation5 + $0x17b0] sm:$0xff]
    %v821 = vld [vmem:[#allocation5 + $0x17b8] sm:$0xff]
    %v822 = vld [vmem:[#allocation5 + $0x17c0] sm:$0xff]
    %v823 = vld [vmem:[#allocation5 + $0x17c8] sm:$0xff]
    %v824 = vld [vmem:[#allocation5 + $0x17d0] sm:$0xff]
    %v825 = vld [vmem:[#allocation5 + $0x17d8] sm:$0xff]
    %v826 = vld [vmem:[#allocation5 + $0x17e0] sm:$0xff]
    %v827 = vld [vmem:[#allocation5 + $0x17e8] sm:$0xff]
    %v828 = vld [vmem:[#allocation5 + $0x17f0] sm:$0xff]
    %v829 = vld [vmem:[#allocation5 + $0x17f8] sm:$0xff]
    %v830 = vld [vmem:[#allocation5 + $0x1800] sm:$0xff]
    %v831 = vld [vmem:[#allocation5 + $0x1808] sm:$0xff]
    %v832 = vld [vmem:[#allocation5 + $0x1810] sm:$0xff]
    %v833 = vld [vmem:[#allocation5 + $0x1818] sm:$0xff]
    %v834 = vld [vmem:[#allocation5 + $0x1820] sm:$0xff]
    %v835 = vld [vmem:[#allocation5 + $0x1828] sm:$0xff]
    %v836 = vld [vmem:[#allocation5 + $0x1830] sm:$0xff]
    %v837 = vld [vmem:[#allocation5 + $0x1838] sm:$0xff]
    %v838 = vld [vmem:[#allocation5 + $0x1840] sm:$0xff]
    %v839 = vld [vmem:[#allocation5 + $0x1848] sm:$0xff]
    %v840 = vld [vmem:[#allocation5 + $0x1850] sm:$0xff]
    %v841 = vld [vmem:[#allocation5 + $0x1858] sm:$0xff]
    %v842 = vld [vmem:[#allocation5 + $0x1860] sm:$0xff]
    %v843 = vld [vmem:[#allocation5 + $0x1868] sm:$0xff]
    %v844 = vld [vmem:[#allocation5 + $0x1870] sm:$0xff]
    %v845 = vld [vmem:[#allocation5 + $0x1878] sm:$0xff]
    %v846 = vld [vmem:[#allocation5 + $0x1880] sm:$0xff]
    %v847 = vld [vmem:[#allocation5 + $0x1888] sm:$0xff]
    %v848 = vld [vmem:[#allocation5 + $0x1890] sm:$0xff]
    %v849 = vld [vmem:[#allocation5 + $0x1898] sm:$0xff]
    %v850 = vld [vmem:[#allocation5 + $0x18a0] sm:$0xff]
    %v851 = vld [vmem:[#allocation5 + $0x18a8] sm:$0xff]
    %v852 = vld [vmem:[#allocation5 + $0x18b0] sm:$0xff]
    %v853 = vld [vmem:[#allocation5 + $0x18b8] sm:$0xff]
    %v854 = vld [vmem:[#allocation5 + $0x18c0] sm:$0xff]
    %v855 = vld [vmem:[#allocation5 + $0x18c8] sm:$0xff]
    %v856 = vld [vmem:[#allocation5 + $0x18d0] sm:$0xff]
    %v857 = vld [vmem:[#allocation5 + $0x18d8] sm:$0xff]
    %v858 = vld [vmem:[#allocation5 + $0x18e0] sm:$0xff]
    %v859 = vld [vmem:[#allocation5 + $0x18e8] sm:$0xff]
    %v860 = vld [vmem:[#allocation5 + $0x18f0] sm:$0xff]
    %v861 = vld [vmem:[#allocation5 + $0x18f8] sm:$0xff]
    %v862 = vld [vmem:[#allocation7] sm:$0x1f]
    %v864 = vlaneseq
    %v865 = vshrl.u32 %v864, 7
    %v866 = vsub.s32 0, %v865
    %v867 = vrot.slane %v862, %v866
    %v868 = vlaneseq
    %v869 = vshrl.u32 %v868, 7
    %v870 = vsub.s32 1, %v869
    %v871 = vrot.slane %v862, %v870
    %v872 = vlaneseq
    %v873 = vshrl.u32 %v872, 7
    %v874 = vsub.s32 2, %v873
    %v875 = vrot.slane %v862, %v874
    %v876 = vlaneseq
    %v877 = vshrl.u32 %v876, 7
    %v878 = vsub.s32 3, %v877
    %v879 = vrot.slane %v862, %v878
    %v880 = vlaneseq
    %v881 = vshrl.u32 %v880, 7
    %v882 = vsub.s32 4, %v881
    %v883 = vrot.slane %v862, %v882
    %889 = vmatprep.subr.mxu0 %v63
    %890 = vmatpush1.msra.mxu0 %v62
    %891 = vmatprep.subr.mxu0 %v68
    %892 = vmatpush1.msra.mxu0 %v67
    %893 = vmatprep.subr.mxu0 %v73
    %894 = vmatpush1.msra.mxu0 %v72
    %895 = vmatprep.subr.mxu0 %v78
    %896 = vmatpush1.msra.mxu0 %v77
    %897 = vmatprep.subr.mxu0 %v83
    %898 = vmatpush1.msra.mxu0 %v82
    %899 = vmatprep.subr.mxu0 %v88
    %900 = vmatpush1.msra.mxu0 %v87
    %901 = vmatprep.subr.mxu0 %v93
    %902 = vmatpush1.msra.mxu0 %v92
    %903 = vmatprep.subr.mxu0 %v98
    %904 = vmatpush1.msra.mxu0 %v97
    %905 = vmatprep.subr.mxu0 %v103
    %906 = vmatpush1.msra.mxu0 %v102
    %907 = vmatprep.subr.mxu0 %v108
    %908 = vmatpush1.msra.mxu0 %v107
    %909 = vmatprep.subr.mxu0 %v113
    %910 = vmatpush1.msra.mxu0 %v112
    %911 = vmatprep.subr.mxu0 %v118
    %912 = vmatpush1.msra.mxu0 %v117
    %913 = vmatprep.subr.mxu0 %v123
    %914 = vmatpush1.msra.mxu0 %v122
    %915 = vmatprep.subr.mxu0 %v128
    %916 = vmatpush1.msra.mxu0 %v127
    %917 = vmatprep.subr.mxu0 %v133
    %918 = vmatpush1.msra.mxu0 %v132
    %919 = vmatprep.subr.mxu0 %v138
    %920 = vmatpush1.msra.mxu0 %v137
    %921 = vmatprep.subr.mxu0 %v143
    %922 = vmatpush1.msra.mxu0 %v142
    %923 = vmatprep.subr.mxu0 %v148
    %924 = vmatpush1.msra.mxu0 %v147
    %925 = vmatprep.subr.mxu0 %v153
    %926 = vmatpush1.msra.mxu0 %v152
    %927 = vmatprep.subr.mxu0 %v158
    %928 = vmatpush1.msra.mxu0 %v157
    %929 = vmatprep.subr.mxu0 %v163
    %930 = vmatpush1.msra.mxu0 %v162
    %931 = vmatprep.subr.mxu0 %v168
    %932 = vmatpush1.msra.mxu0 %v167
    %933 = vmatprep.subr.mxu0 %v173
    %934 = vmatpush1.msra.mxu0 %v172
    %935 = vmatprep.subr.mxu0 %v178
    %936 = vmatpush1.msra.mxu0 %v177
    %937 = vmatprep.subr.mxu0 %v183
    %938 = vmatpush1.msra.mxu0 %v182
    %939 = vmatprep.subr.mxu0 %v188
    %940 = vmatpush1.msra.mxu0 %v187
    %941 = vmatprep.subr.mxu0 %v193
    %942 = vmatpush1.msra.mxu0 %v192
    %943 = vmatprep.subr.mxu0 %v198
    %944 = vmatpush1.msra.mxu0 %v197
    %945 = vmatprep.subr.mxu0 %v203
    %946 = vmatpush1.msra.mxu0 %v202
    %947 = vmatprep.subr.mxu0 %v208
    %948 = vmatpush1.msra.mxu0 %v207
    %949 = vmatprep.subr.mxu0 %v213
    %950 = vmatpush1.msra.mxu0 %v212
    %951 = vmatprep.subr.mxu0 %v218
    %952 = vmatpush1.msra.mxu0 %v217
    %953 = vmatprep.mubr.f32.mxu0 %v53
    %954 = vmatmul.mubr.f32.gmra.mrb[0].mxu0 %v52
    %v955 = vpop.f32.mrb[0].mxu0
    %v956 = vadd.f32 %v867, %v955
    %v957 = vpop.f32.mrb[0].mxu0
    %v958 = vadd.f32 %v871, %v957
    %959 = vdwg.mxu0
    %960 = vmatprep.subr.mxu0 %v223
    %961 = vmatpush1.msra.mxu0 %v222
    %962 = vmatprep.subr.mxu0 %v228
    %963 = vmatpush1.msra.mxu0 %v227
    %964 = vmatprep.subr.mxu0 %v233
    %965 = vmatpush1.msra.mxu0 %v232
    %966 = vmatprep.subr.mxu0 %v238
    %967 = vmatpush1.msra.mxu0 %v237
    %968 = vmatprep.subr.mxu0 %v243
    %969 = vmatpush1.msra.mxu0 %v242
    %970 = vmatprep.subr.mxu0 %v248
    %971 = vmatpush1.msra.mxu0 %v247
    %972 = vmatprep.subr.mxu0 %v253
    %973 = vmatpush1.msra.mxu0 %v252
    %974 = vmatprep.subr.mxu0 %v258
    %975 = vmatpush1.msra.mxu0 %v257
    %976 = vmatprep.subr.mxu0 %v263
    %977 = vmatpush1.msra.mxu0 %v262
    %978 = vmatprep.subr.mxu0 %v268
    %979 = vmatpush1.msra.mxu0 %v267
    %980 = vmatprep.subr.mxu0 %v273
    %981 = vmatpush1.msra.mxu0 %v272
    %982 = vmatprep.subr.mxu0 %v278
    %983 = vmatpush1.msra.mxu0 %v277
    %984 = vmatprep.subr.mxu0 %v283
    %985 = vmatpush1.msra.mxu0 %v282
    %986 = vmatprep.subr.mxu0 %v288
    %987 = vmatpush1.msra.mxu0 %v287
    %988 = vmatprep.subr.mxu0 %v293
    %989 = vmatpush1.msra.mxu0 %v292
    %990 = vmatprep.subr.mxu0 %v298
    %991 = vmatpush1.msra.mxu0 %v297
    %992 = vmatprep.subr.mxu0 %v303
    %993 = vmatpush1.msra.mxu0 %v302
    %994 = vmatprep.subr.mxu0 %v308
    %995 = vmatpush1.msra.mxu0 %v307
    %996 = vmatprep.subr.mxu0 %v313
    %997 = vmatpush1.msra.mxu0 %v312
    %998 = vmatprep.subr.mxu0 %v318
    %999 = vmatpush1.msra.mxu0 %v317
    %1000 = vmatprep.subr.mxu0 %v323
    %1001 = vmatpush1.msra.mxu0 %v322
    %1002 = vmatprep.subr.mxu0 %v328
    %1003 = vmatpush1.msra.mxu0 %v327
    %1004 = vmatprep.subr.mxu0 %v333
    %1005 = vmatpush1.msra.mxu0 %v332
    %1006 = vmatprep.subr.mxu0 %v338
    %1007 = vmatpush1.msra.mxu0 %v337
    %1008 = vmatprep.subr.mxu0 %v343
    %1009 = vmatpush1.msra.mxu0 %v342
    %1010 = vmatprep.subr.mxu0 %v348
    %1011 = vmatpush1.msra.mxu0 %v347
    %1012 = vmatprep.subr.mxu0 %v353
    %1013 = vmatpush1.msra.mxu0 %v352
    %1014 = vmatprep.subr.mxu0 %v358
    %1015 = vmatpush1.msra.mxu0 %v357
    %1016 = vmatprep.subr.mxu0 %v363
    %1017 = vmatpush1.msra.mxu0 %v362
    %1018 = vmatprep.subr.mxu0 %v368
    %1019 = vmatpush1.msra.mxu0 %v367
    %1020 = vmatprep.subr.mxu0 %v373
    %1021 = vmatpush1.msra.mxu0 %v372
    %1022 = vmatprep.subr.mxu0 %v378
    %1023 = vmatpush1.msra.mxu0 %v377
    %1024 = vmatprep.mubr.f32.mxu0 %v55
    %1025 = vmatmul.mubr.f32.gmra.mrb[0].mxu0 %v54
    %v1026 = vpop.f32.mrb[0].mxu0
    %v1027 = vadd.f32 %v956, %v1026
    %v1028 = vpop.f32.mrb[0].mxu0
    %v1029 = vadd.f32 %v958, %v1028
    %1030 = vdwg.mxu0
    %1031 = vmatprep.subr.mxu0 %v383
    %1032 = vmatpush1.msra.mxu0 %v382
    %1033 = vmatprep.subr.mxu0 %v388
    %1034 = vmatpush1.msra.mxu0 %v387
    %1035 = vmatprep.subr.mxu0 %v393
    %1036 = vmatpush1.msra.mxu0 %v392
    %1037 = vmatprep.subr.mxu0 %v398
    %1038 = vmatpush1.msra.mxu0 %v397
    %1039 = vmatprep.subr.mxu0 %v403
    %1040 = vmatpush1.msra.mxu0 %v402
    %1041 = vmatprep.subr.mxu0 %v408
    %1042 = vmatpush1.msra.mxu0 %v407
    %1043 = vmatprep.subr.mxu0 %v413
    %1044 = vmatpush1.msra.mxu0 %v412
    %1045 = vmatprep.subr.mxu0 %v418
    %1046 = vmatpush1.msra.mxu0 %v417
    %1047 = vmatprep.subr.mxu0 %v423
    %1048 = vmatpush1.msra.mxu0 %v422
    %1049 = vmatprep.subr.mxu0 %v428
    %1050 = vmatpush1.msra.mxu0 %v427
    %1051 = vmatprep.subr.mxu0 %v433
    %1052 = vmatpush1.msra.mxu0 %v432
    %1053 = vmatprep.subr.mxu0 %v438
    %1054 = vmatpush1.msra.mxu0 %v437
    %1055 = vmatprep.subr.mxu0 %v443
    %1056 = vmatpush1.msra.mxu0 %v442
    %1057 = vmatprep.subr.mxu0 %v448
    %1058 = vmatpush1.msra.mxu0 %v447
    %1059 = vmatprep.subr.mxu0 %v453
    %1060 = vmatpush1.msra.mxu0 %v452
    %1061 = vmatprep.subr.mxu0 %v458
    %1062 = vmatpush1.msra.mxu0 %v457
    %1063 = vmatprep.subr.mxu0 %v463
    %1064 = vmatpush1.msra.mxu0 %v462
    %1065 = vmatprep.subr.mxu0 %v468
    %1066 = vmatpush1.msra.mxu0 %v467
    %1067 = vmatprep.subr.mxu0 %v473
    %1068 = vmatpush1.msra.mxu0 %v472
    %1069 = vmatprep.subr.mxu0 %v478
    %1070 = vmatpush1.msra.mxu0 %v477
    %1071 = vmatprep.subr.mxu0 %v483
    %1072 = vmatpush1.msra.mxu0 %v482
    %1073 = vmatprep.subr.mxu0 %v488
    %1074 = vmatpush1.msra.mxu0 %v487
    %1075 = vmatprep.subr.mxu0 %v493
    %1076 = vmatpush1.msra.mxu0 %v492
    %1077 = vmatprep.subr.mxu0 %v498
    %1078 = vmatpush1.msra.mxu0 %v497
    %1079 = vmatprep.subr.mxu0 %v503
    %1080 = vmatpush1.msra.mxu0 %v502
    %1081 = vmatprep.subr.mxu0 %v508
    %1082 = vmatpush1.msra.mxu0 %v507
    %1083 = vmatprep.subr.mxu0 %v513
    %1084 = vmatpush1.msra.mxu0 %v512
    %1085 = vmatprep.subr.mxu0 %v518
    %1086 = vmatpush1.msra.mxu0 %v517
    %1087 = vmatprep.subr.mxu0 %v523
    %1088 = vmatpush1.msra.mxu0 %v522
    %1089 = vmatprep.subr.mxu0 %v528
    %1090 = vmatpush1.msra.mxu0 %v527
    %1091 = vmatprep.subr.mxu0 %v533
    %1092 = vmatpush1.msra.mxu0 %v532
    %1093 = vmatprep.subr.mxu0 %v538
    %1094 = vmatpush1.msra.mxu0 %v537
    %1095 = vmatprep.mubr.f32.mxu0 %v57
    %1096 = vmatmul.mubr.f32.gmra.mrb[0].mxu0 %v56
    %v1097 = vpop.f32.mrb[0].mxu0
    %v1098 = vadd.f32 %v1027, %v1097
    %v1099 = vpop.f32.mrb[0].mxu0
    %v1100 = vadd.f32 %v1029, %v1099
    %1101 = vdwg.mxu0
    %1102 = vmatprep.subr.mxu0 %v543
    %1103 = vmatpush1.msra.mxu0 %v542
    %1104 = vmatprep.subr.mxu0 %v548
    %1105 = vmatpush1.msra.mxu0 %v547
    %1106 = vmatprep.subr.mxu0 %v553
    %1107 = vmatpush1.msra.mxu0 %v552
    %1108 = vmatprep.subr.mxu0 %v558
    %1109 = vmatpush1.msra.mxu0 %v557
    %1110 = vmatprep.subr.mxu0 %v563
    %1111 = vmatpush1.msra.mxu0 %v562
    %1112 = vmatprep.subr.mxu0 %v568
    %1113 = vmatpush1.msra.mxu0 %v567
    %1114 = vmatprep.subr.mxu0 %v573
    %1115 = vmatpush1.msra.mxu0 %v572
    %1116 = vmatprep.subr.mxu0 %v578
    %1117 = vmatpush1.msra.mxu0 %v577
    %1118 = vmatprep.subr.mxu0 %v583
    %1119 = vmatpush1.msra.mxu0 %v582
    %1120 = vmatprep.subr.mxu0 %v588
    %1121 = vmatpush1.msra.mxu0 %v587
    %1122 = vmatprep.subr.mxu0 %v593
    %1123 = vmatpush1.msra.mxu0 %v592
    %1124 = vmatprep.subr.mxu0 %v598
    %1125 = vmatpush1.msra.mxu0 %v597
    %1126 = vmatprep.subr.mxu0 %v603
    %1127 = vmatpush1.msra.mxu0 %v602
    %1128 = vmatprep.subr.mxu0 %v608
    %1129 = vmatpush1.msra.mxu0 %v607
    %1130 = vmatprep.subr.mxu0 %v613
    %1131 = vmatpush1.msra.mxu0 %v612
    %1132 = vmatprep.subr.mxu0 %v618
    %1133 = vmatpush1.msra.mxu0 %v617
    %1134 = vmatprep.subr.mxu0 %v623
    %1135 = vmatpush1.msra.mxu0 %v622
    %1136 = vmatprep.subr.mxu0 %v628
    %1137 = vmatpush1.msra.mxu0 %v627
    %1138 = vmatprep.subr.mxu0 %v633
    %1139 = vmatpush1.msra.mxu0 %v632
    %1140 = vmatprep.subr.mxu0 %v638
    %1141 = vmatpush1.msra.mxu0 %v637
    %1142 = vmatprep.subr.mxu0 %v643
    %1143 = vmatpush1.msra.mxu0 %v642
    %1144 = vmatprep.subr.mxu0 %v648
    %1145 = vmatpush1.msra.mxu0 %v647
    %1146 = vmatprep.subr.mxu0 %v653
    %1147 = vmatpush1.msra.mxu0 %v652
    %1148 = vmatprep.subr.mxu0 %v658
    %1149 = vmatpush1.msra.mxu0 %v657
    %1150 = vmatprep.subr.mxu0 %v663
    %1151 = vmatpush1.msra.mxu0 %v662
    %1152 = vmatprep.subr.mxu0 %v668
    %1153 = vmatpush1.msra.mxu0 %v667
    %1154 = vmatprep.subr.mxu0 %v673
    %1155 = vmatpush1.msra.mxu0 %v672
    %1156 = vmatprep.subr.mxu0 %v678
    %1157 = vmatpush1.msra.mxu0 %v677
    %1158 = vmatprep.subr.mxu0 %v683
    %1159 = vmatpush1.msra.mxu0 %v682
    %1160 = vmatprep.subr.mxu0 %v688
    %1161 = vmatpush1.msra.mxu0 %v687
    %1162 = vmatprep.subr.mxu0 %v693
    %1163 = vmatpush1.msra.mxu0 %v692
    %1164 = vmatprep.subr.mxu0 %v698
    %1165 = vmatpush1.msra.mxu0 %v697
    %1166 = vmatprep.mubr.f32.mxu0 %v59
    %1167 = vmatmul.mubr.f32.gmra.mrb[0].mxu0 %v58
    %v1168 = vpop.f32.mrb[0].mxu0
    %v1169 = vadd.f32 %v1098, %v1168
    %v1170 = vpop.f32.mrb[0].mxu0
    %v1171 = vadd.f32 %v1100, %v1170
    %1172 = vdwg.mxu0
    %1173 = vmatprep.subr.mxu0 %v703
    %1174 = vmatpush1.msra.mxu0 %v702
    %1175 = vmatprep.subr.mxu0 %v708
    %1176 = vmatpush1.msra.mxu0 %v707
    %1177 = vmatprep.subr.mxu0 %v713
    %1178 = vmatpush1.msra.mxu0 %v712
    %1179 = vmatprep.subr.mxu0 %v718
    %1180 = vmatpush1.msra.mxu0 %v717
    %1181 = vmatprep.subr.mxu0 %v723
    %1182 = vmatpush1.msra.mxu0 %v722
    %1183 = vmatprep.subr.mxu0 %v728
    %1184 = vmatpush1.msra.mxu0 %v727
    %1185 = vmatprep.subr.mxu0 %v733
    %1186 = vmatpush1.msra.mxu0 %v732
    %1187 = vmatprep.subr.mxu0 %v738
    %1188 = vmatpush1.msra.mxu0 %v737
    %1189 = vmatprep.subr.mxu0 %v743
    %1190 = vmatpush1.msra.mxu0 %v742
    %1191 = vmatprep.subr.mxu0 %v748
    %1192 = vmatpush1.msra.mxu0 %v747
    %1193 = vmatprep.subr.mxu0 %v753
    %1194 = vmatpush1.msra.mxu0 %v752
    %1195 = vmatprep.subr.mxu0 %v758
    %1196 = vmatpush1.msra.mxu0 %v757
    %1197 = vmatprep.subr.mxu0 %v763
    %1198 = vmatpush1.msra.mxu0 %v762
    %1199 = vmatprep.subr.mxu0 %v768
    %1200 = vmatpush1.msra.mxu0 %v767
    %1201 = vmatprep.subr.mxu0 %v773
    %1202 = vmatpush1.msra.mxu0 %v772
    %1203 = vmatprep.subr.mxu0 %v778
    %1204 = vmatpush1.msra.mxu0 %v777
    %1205 = vmatprep.subr.mxu0 %v783
    %1206 = vmatpush1.msra.mxu0 %v782
    %1207 = vmatprep.subr.mxu0 %v788
    %1208 = vmatpush1.msra.mxu0 %v787
    %1209 = vmatprep.subr.mxu0 %v793
    %1210 = vmatpush1.msra.mxu0 %v792
    %1211 = vmatprep.subr.mxu0 %v798
    %1212 = vmatpush1.msra.mxu0 %v797
    %1213 = vmatprep.subr.mxu0 %v803
    %1214 = vmatpush1.msra.mxu0 %v802
    %1215 = vmatprep.subr.mxu0 %v808
    %1216 = vmatpush1.msra.mxu0 %v807
    %1217 = vmatprep.subr.mxu0 %v813
    %1218 = vmatpush1.msra.mxu0 %v812
    %1219 = vmatprep.subr.mxu0 %v818
    %1220 = vmatpush1.msra.mxu0 %v817
    %1221 = vmatprep.subr.mxu0 %v823
    %1222 = vmatpush1.msra.mxu0 %v822
    %1223 = vmatprep.subr.mxu0 %v828
    %1224 = vmatpush1.msra.mxu0 %v827
    %1225 = vmatprep.subr.mxu0 %v833
    %1226 = vmatpush1.msra.mxu0 %v832
    %1227 = vmatprep.subr.mxu0 %v838
    %1228 = vmatpush1.msra.mxu0 %v837
    %1229 = vmatprep.subr.mxu0 %v843
    %1230 = vmatpush1.msra.mxu0 %v842
    %1231 = vmatprep.subr.mxu0 %v848
    %1232 = vmatpush1.msra.mxu0 %v847
    %1233 = vmatprep.subr.mxu0 %v853
    %1234 = vmatpush1.msra.mxu0 %v852
    %1235 = vmatprep.subr.mxu0 %v858
    %1236 = vmatpush1.msra.mxu0 %v857
    %1237 = vmatprep.mubr.f32.mxu0 %v61
    %1238 = vmatmul.mubr.f32.gmra.mrb[0].mxu0 %v60
    %v1239 = vpop.f32.mrb[0].mxu0
    %v1240 = vadd.f32 %v1169, %v1239
    %v1241 = vpop.f32.mrb[0].mxu0
    %v1242 = vadd.f32 %v1171, %v1241
    %1243 = vdwg.mxu0
    %1244 = vmatprep.subr.mxu0 %v65
    %1245 = vmatpush1.msra.mxu0 %v64
    %1246 = vmatprep.subr.mxu0 %v70
    %1247 = vmatpush1.msra.mxu0 %v69
    %1248 = vmatprep.subr.mxu0 %v75
    %1249 = vmatpush1.msra.mxu0 %v74
    %1250 = vmatprep.subr.mxu0 %v80
    %1251 = vmatpush1.msra.mxu0 %v79
    %1252 = vmatprep.subr.mxu0 %v85
    %1253 = vmatpush1.msra.mxu0 %v84
    %1254 = vmatprep.subr.mxu0 %v90
    %1255 = vmatpush1.msra.mxu0 %v89
    %1256 = vmatprep.subr.mxu0 %v95
    %1257 = vmatpush1.msra.mxu0 %v94
    %1258 = vmatprep.subr.mxu0 %v100
    %1259 = vmatpush1.msra.mxu0 %v99
    %1260 = vmatprep.subr.mxu0 %v105
    %1261 = vmatpush1.msra.mxu0 %v104
    %1262 = vmatprep.subr.mxu0 %v110
    %1263 = vmatpush1.msra.mxu0 %v109
    %1264 = vmatprep.subr.mxu0 %v115
    %1265 = vmatpush1.msra.mxu0 %v114
    %1266 = vmatprep.subr.mxu0 %v120
    %1267 = vmatpush1.msra.mxu0 %v119
    %1268 = vmatprep.subr.mxu0 %v125
    %1269 = vmatpush1.msra.mxu0 %v124
    %1270 = vmatprep.subr.mxu0 %v130
    %1271 = vmatpush1.msra.mxu0 %v129
    %1272 = vmatprep.subr.mxu0 %v135
    %1273 = vmatpush1.msra.mxu0 %v134
    %1274 = vmatprep.subr.mxu0 %v140
    %1275 = vmatpush1.msra.mxu0 %v139
    %1276 = vmatprep.subr.mxu0 %v145
    %1277 = vmatpush1.msra.mxu0 %v144
    %1278 = vmatprep.subr.mxu0 %v150
    %1279 = vmatpush1.msra.mxu0 %v149
    %1280 = vmatprep.subr.mxu0 %v155
    %1281 = vmatpush1.msra.mxu0 %v154
    %1282 = vmatprep.subr.mxu0 %v160
    %1283 = vmatpush1.msra.mxu0 %v159
    %1284 = vmatprep.subr.mxu0 %v165
    %1285 = vmatpush1.msra.mxu0 %v164
    %1286 = vmatprep.subr.mxu0 %v170
    %1287 = vmatpush1.msra.mxu0 %v169
    %1288 = vmatprep.subr.mxu0 %v175
    %1289 = vmatpush1.msra.mxu0 %v174
    %1290 = vmatprep.subr.mxu0 %v180
    %1291 = vmatpush1.msra.mxu0 %v179
    %1292 = vmatprep.subr.mxu0 %v185
    %1293 = vmatpush1.msra.mxu0 %v184
    %1294 = vmatprep.subr.mxu0 %v190
    %1295 = vmatpush1.msra.mxu0 %v189
    %1296 = vmatprep.subr.mxu0 %v195
    %1297 = vmatpush1.msra.mxu0 %v194
    %1298 = vmatprep.subr.mxu0 %v200
    %1299 = vmatpush1.msra.mxu0 %v199
    %1300 = vmatprep.subr.mxu0 %v205
    %1301 = vmatpush1.msra.mxu0 %v204
    %1302 = vmatprep.subr.mxu0 %v210
    %1303 = vmatpush1.msra.mxu0 %v209
    %1304 = vmatprep.subr.mxu0 %v215
    %1305 = vmatpush1.msra.mxu0 %v214
    %1306 = vmatprep.subr.mxu0 %v220
    %1307 = vmatpush1.msra.mxu0 %v219
    %1308 = vmatprep.mubr.f32.mxu0 %v53
    %1309 = vmatmul.mubr.f32.gmra.mrb[0].mxu0 %v52
    %v1310 = vpop.f32.mrb[0].mxu0
    %v1311 = vadd.f32 %v875, %v1310
    %v1312 = vpop.f32.mrb[0].mxu0
    %v1313 = vadd.f32 %v879, %v1312
    %1314 = vdwg.mxu0
    %1315 = vmatprep.subr.mxu0 %v225
    %1316 = vmatpush1.msra.mxu0 %v224
    %1317 = vmatprep.subr.mxu0 %v230
    %1318 = vmatpush1.msra.mxu0 %v229
    %1319 = vmatprep.subr.mxu0 %v235
    %1320 = vmatpush1.msra.mxu0 %v234
    %1321 = vmatprep.subr.mxu0 %v240
    %1322 = vmatpush1.msra.mxu0 %v239
    %1323 = vmatprep.subr.mxu0 %v245
    %1324 = vmatpush1.msra.mxu0 %v244
    %1325 = vmatprep.subr.mxu0 %v250
    %1326 = vmatpush1.msra.mxu0 %v249
    %1327 = vmatprep.subr.mxu0 %v255
    %1328 = vmatpush1.msra.mxu0 %v254
    %1329 = vmatprep.subr.mxu0 %v260
    %1330 = vmatpush1.msra.mxu0 %v259
    %1331 = vmatprep.subr.mxu0 %v265
    %1332 = vmatpush1.msra.mxu0 %v264
    %1333 = vmatprep.subr.mxu0 %v270
    %1334 = vmatpush1.msra.mxu0 %v269
    %1335 = vmatprep.subr.mxu0 %v275
    %1336 = vmatpush1.msra.mxu0 %v274
    %1337 = vmatprep.subr.mxu0 %v280
    %1338 = vmatpush1.msra.mxu0 %v279
    %1339 = vmatprep.subr.mxu0 %v285
    %1340 = vmatpush1.msra.mxu0 %v284
    %1341 = vmatprep.subr.mxu0 %v290
    %1342 = vmatpush1.msra.mxu0 %v289
    %1343 = vmatprep.subr.mxu0 %v295
    %1344 = vmatpush1.msra.mxu0 %v294
    %1345 = vmatprep.subr.mxu0 %v300
    %1346 = vmatpush1.msra.mxu0 %v299
    %1347 = vmatprep.subr.mxu0 %v305
    %1348 = vmatpush1.msra.mxu0 %v304
    %1349 = vmatprep.subr.mxu0 %v310
    %1350 = vmatpush1.msra.mxu0 %v309
    %1351 = vmatprep.subr.mxu0 %v315
    %1352 = vmatpush1.msra.mxu0 %v314
    %1353 = vmatprep.subr.mxu0 %v320
    %1354 = vmatpush1.msra.mxu0 %v319
    %1355 = vmatprep.subr.mxu0 %v325
    %1356 = vmatpush1.msra.mxu0 %v324
    %1357 = vmatprep.subr.mxu0 %v330
    %1358 = vmatpush1.msra.mxu0 %v329
    %1359 = vmatprep.subr.mxu0 %v335
    %1360 = vmatpush1.msra.mxu0 %v334
    %1361 = vmatprep.subr.mxu0 %v340
    %1362 = vmatpush1.msra.mxu0 %v339
    %1363 = vmatprep.subr.mxu0 %v345
    %1364 = vmatpush1.msra.mxu0 %v344
    %1365 = vmatprep.subr.mxu0 %v350
    %1366 = vmatpush1.msra.mxu0 %v349
    %1367 = vmatprep.subr.mxu0 %v355
    %1368 = vmatpush1.msra.mxu0 %v354
    %1369 = vmatprep.subr.mxu0 %v360
    %1370 = vmatpush1.msra.mxu0 %v359
    %1371 = vmatprep.subr.mxu0 %v365
    %1372 = vmatpush1.msra.mxu0 %v364
    %1373 = vmatprep.subr.mxu0 %v370
    %1374 = vmatpush1.msra.mxu0 %v369
    %1375 = vmatprep.subr.mxu0 %v375
    %1376 = vmatpush1.msra.mxu0 %v374
    %1377 = vmatprep.subr.mxu0 %v380
    %1378 = vmatpush1.msra.mxu0 %v379
    %1379 = vmatprep.mubr.f32.mxu0 %v55
    %1380 = vmatmul.mubr.f32.gmra.mrb[0].mxu0 %v54
    %v1381 = vpop.f32.mrb[0].mxu0
    %v1382 = vadd.f32 %v1311, %v1381
    %v1383 = vpop.f32.mrb[0].mxu0
    %v1384 = vadd.f32 %v1313, %v1383
    %1385 = vdwg.mxu0
    %1386 = vmatprep.subr.mxu0 %v385
    %1387 = vmatpush1.msra.mxu0 %v384
    %1388 = vmatprep.subr.mxu0 %v390
    %1389 = vmatpush1.msra.mxu0 %v389
    %1390 = vmatprep.subr.mxu0 %v395
    %1391 = vmatpush1.msra.mxu0 %v394
    %1392 = vmatprep.subr.mxu0 %v400
    %1393 = vmatpush1.msra.mxu0 %v399
    %1394 = vmatprep.subr.mxu0 %v405
    %1395 = vmatpush1.msra.mxu0 %v404
    %1396 = vmatprep.subr.mxu0 %v410
    %1397 = vmatpush1.msra.mxu0 %v409
    %1398 = vmatprep.subr.mxu0 %v415
    %1399 = vmatpush1.msra.mxu0 %v414
    %1400 = vmatprep.subr.mxu0 %v420
    %1401 = vmatpush1.msra.mxu0 %v419
    %1402 = vmatprep.subr.mxu0 %v425
    %1403 = vmatpush1.msra.mxu0 %v424
    %1404 = vmatprep.subr.mxu0 %v430
    %1405 = vmatpush1.msra.mxu0 %v429
    %1406 = vmatprep.subr.mxu0 %v435
    %1407 = vmatpush1.msra.mxu0 %v434
    %1408 = vmatprep.subr.mxu0 %v440
    %1409 = vmatpush1.msra.mxu0 %v439
    %1410 = vmatprep.subr.mxu0 %v445
    %1411 = vmatpush1.msra.mxu0 %v444
    %1412 = vmatprep.subr.mxu0 %v450
    %1413 = vmatpush1.msra.mxu0 %v449
    %1414 = vmatprep.subr.mxu0 %v455
    %1415 = vmatpush1.msra.mxu0 %v454
    %1416 = vmatprep.subr.mxu0 %v460
    %1417 = vmatpush1.msra.mxu0 %v459
    %1418 = vmatprep.subr.mxu0 %v465
    %1419 = vmatpush1.msra.mxu0 %v464
    %1420 = vmatprep.subr.mxu0 %v470
    %1421 = vmatpush1.msra.mxu0 %v469
    %1422 = vmatprep.subr.mxu0 %v475
    %1423 = vmatpush1.msra.mxu0 %v474
    %1424 = vmatprep.subr.mxu0 %v480
    %1425 = vmatpush1.msra.mxu0 %v479
    %1426 = vmatprep.subr.mxu0 %v485
    %1427 = vmatpush1.msra.mxu0 %v484
    %1428 = vmatprep.subr.mxu0 %v490
    %1429 = vmatpush1.msra.mxu0 %v489
    %1430 = vmatprep.subr.mxu0 %v495
    %1431 = vmatpush1.msra.mxu0 %v494
    %1432 = vmatprep.subr.mxu0 %v500
    %1433 = vmatpush1.msra.mxu0 %v499
    %1434 = vmatprep.subr.mxu0 %v505
    %1435 = vmatpush1.msra.mxu0 %v504
    %1436 = vmatprep.subr.mxu0 %v510
    %1437 = vmatpush1.msra.mxu0 %v509
    %1438 = vmatprep.subr.mxu0 %v515
    %1439 = vmatpush1.msra.mxu0 %v514
    %1440 = vmatprep.subr.mxu0 %v520
    %1441 = vmatpush1.msra.mxu0 %v519
    %1442 = vmatprep.subr.mxu0 %v525
    %1443 = vmatpush1.msra.mxu0 %v524
    %1444 = vmatprep.subr.mxu0 %v530
    %1445 = vmatpush1.msra.mxu0 %v529
    %1446 = vmatprep.subr.mxu0 %v535
    %1447 = vmatpush1.msra.mxu0 %v534
    %1448 = vmatprep.subr.mxu0 %v540
    %1449 = vmatpush1.msra.mxu0 %v539
    %1450 = vmatprep.mubr.f32.mxu0 %v57
    %1451 = vmatmul.mubr.f32.gmra.mrb[0].mxu0 %v56
    %v1452 = vpop.f32.mrb[0].mxu0
    %v1453 = vadd.f32 %v1382, %v1452
    %v1454 = vpop.f32.mrb[0].mxu0
    %v1455 = vadd.f32 %v1384, %v1454
    %1456 = vdwg.mxu0
    %1457 = vmatprep.subr.mxu0 %v545
    %1458 = vmatpush1.msra.mxu0 %v544
    %1459 = vmatprep.subr.mxu0 %v550
    %1460 = vmatpush1.msra.mxu0 %v549
    %1461 = vmatprep.subr.mxu0 %v555
    %1462 = vmatpush1.msra.mxu0 %v554
    %1463 = vmatprep.subr.mxu0 %v560
    %1464 = vmatpush1.msra.mxu0 %v559
    %1465 = vmatprep.subr.mxu0 %v565
    %1466 = vmatpush1.msra.mxu0 %v564
    %1467 = vmatprep.subr.mxu0 %v570
    %1468 = vmatpush1.msra.mxu0 %v569
    %1469 = vmatprep.subr.mxu0 %v575
    %1470 = vmatpush1.msra.mxu0 %v574
    %1471 = vmatprep.subr.mxu0 %v580
    %1472 = vmatpush1.msra.mxu0 %v579
    %1473 = vmatprep.subr.mxu0 %v585
    %1474 = vmatpush1.msra.mxu0 %v584
    %1475 = vmatprep.subr.mxu0 %v590
    %1476 = vmatpush1.msra.mxu0 %v589
    %1477 = vmatprep.subr.mxu0 %v595
    %1478 = vmatpush1.msra.mxu0 %v594
    %1479 = vmatprep.subr.mxu0 %v600
    %1480 = vmatpush1.msra.mxu0 %v599
    %1481 = vmatprep.subr.mxu0 %v605
    %1482 = vmatpush1.msra.mxu0 %v604
    %1483 = vmatprep.subr.mxu0 %v610
    %1484 = vmatpush1.msra.mxu0 %v609
    %1485 = vmatprep.subr.mxu0 %v615
    %1486 = vmatpush1.msra.mxu0 %v614
    %1487 = vmatprep.subr.mxu0 %v620
    %1488 = vmatpush1.msra.mxu0 %v619
    %1489 = vmatprep.subr.mxu0 %v625
    %1490 = vmatpush1.msra.mxu0 %v624
    %1491 = vmatprep.subr.mxu0 %v630
    %1492 = vmatpush1.msra.mxu0 %v629
    %1493 = vmatprep.subr.mxu0 %v635
    %1494 = vmatpush1.msra.mxu0 %v634
    %1495 = vmatprep.subr.mxu0 %v640
    %1496 = vmatpush1.msra.mxu0 %v639
    %1497 = vmatprep.subr.mxu0 %v645
    %1498 = vmatpush1.msra.mxu0 %v644
    %1499 = vmatprep.subr.mxu0 %v650
    %1500 = vmatpush1.msra.mxu0 %v649
    %1501 = vmatprep.subr.mxu0 %v655
    %1502 = vmatpush1.msra.mxu0 %v654
    %1503 = vmatprep.subr.mxu0 %v660
    %1504 = vmatpush1.msra.mxu0 %v659
    %1505 = vmatprep.subr.mxu0 %v665
    %1506 = vmatpush1.msra.mxu0 %v664
    %1507 = vmatprep.subr.mxu0 %v670
    %1508 = vmatpush1.msra.mxu0 %v669
    %1509 = vmatprep.subr.mxu0 %v675
    %1510 = vmatpush1.msra.mxu0 %v674
    %1511 = vmatprep.subr.mxu0 %v680
    %1512 = vmatpush1.msra.mxu0 %v679
    %1513 = vmatprep.subr.mxu0 %v685
    %1514 = vmatpush1.msra.mxu0 %v684
    %1515 = vmatprep.subr.mxu0 %v690
    %1516 = vmatpush1.msra.mxu0 %v689
    %1517 = vmatprep.subr.mxu0 %v695
    %1518 = vmatpush1.msra.mxu0 %v694
    %1519 = vmatprep.subr.mxu0 %v700
    %1520 = vmatpush1.msra.mxu0 %v699
    %1521 = vmatprep.mubr.f32.mxu0 %v59
    %1522 = vmatmul.mubr.f32.gmra.mrb[0].mxu0 %v58
    %v1523 = vpop.f32.mrb[0].mxu0
    %v1524 = vadd.f32 %v1453, %v1523
    %v1525 = vpop.f32.mrb[0].mxu0
    %v1526 = vadd.f32 %v1455, %v1525
    %1527 = vdwg.mxu0
    %1528 = vmatprep.subr.mxu0 %v705
    %1529 = vmatpush1.msra.mxu0 %v704
    %1530 = vmatprep.subr.mxu0 %v710
    %1531 = vmatpush1.msra.mxu0 %v709
    %1532 = vmatprep.subr.mxu0 %v715
    %1533 = vmatpush1.msra.mxu0 %v714
    %1534 = vmatprep.subr.mxu0 %v720
    %1535 = vmatpush1.msra.mxu0 %v719
    %1536 = vmatprep.subr.mxu0 %v725
    %1537 = vmatpush1.msra.mxu0 %v724
    %1538 = vmatprep.subr.mxu0 %v730
    %1539 = vmatpush1.msra.mxu0 %v729
    %1540 = vmatprep.subr.mxu0 %v735
    %1541 = vmatpush1.msra.mxu0 %v734
    %1542 = vmatprep.subr.mxu0 %v740
    %1543 = vmatpush1.msra.mxu0 %v739
    %1544 = vmatprep.subr.mxu0 %v745
    %1545 = vmatpush1.msra.mxu0 %v744
    %1546 = vmatprep.subr.mxu0 %v750
    %1547 = vmatpush1.msra.mxu0 %v749
    %1548 = vmatprep.subr.mxu0 %v755
    %1549 = vmatpush1.msra.mxu0 %v754
    %1550 = vmatprep.subr.mxu0 %v760
    %1551 = vmatpush1.msra.mxu0 %v759
    %1552 = vmatprep.subr.mxu0 %v765
    %1553 = vmatpush1.msra.mxu0 %v764
    %1554 = vmatprep.subr.mxu0 %v770
    %1555 = vmatpush1.msra.mxu0 %v769
    %1556 = vmatprep.subr.mxu0 %v775
    %1557 = vmatpush1.msra.mxu0 %v774
    %1558 = vmatprep.subr.mxu0 %v780
    %1559 = vmatpush1.msra.mxu0 %v779
    %1560 = vmatprep.subr.mxu0 %v785
    %1561 = vmatpush1.msra.mxu0 %v784
    %1562 = vmatprep.subr.mxu0 %v790
    %1563 = vmatpush1.msra.mxu0 %v789
    %1564 = vmatprep.subr.mxu0 %v795
    %1565 = vmatpush1.msra.mxu0 %v794
    %1566 = vmatprep.subr.mxu0 %v800
    %1567 = vmatpush1.msra.mxu0 %v799
    %1568 = vmatprep.subr.mxu0 %v805
    %1569 = vmatpush1.msra.mxu0 %v804
    %1570 = vmatprep.subr.mxu0 %v810
    %1571 = vmatpush1.msra.mxu0 %v809
    %1572 = vmatprep.subr.mxu0 %v815
    %1573 = vmatpush1.msra.mxu0 %v814
    %1574 = vmatprep.subr.mxu0 %v820
    %1575 = vmatpush1.msra.mxu0 %v819
    %1576 = vmatprep.subr.mxu0 %v825
    %1577 = vmatpush1.msra.mxu0 %v824
    %1578 = vmatprep.subr.mxu0 %v830
    %1579 = vmatpush1.msra.mxu0 %v829
    %1580 = vmatprep.subr.mxu0 %v835
    %1581 = vmatpush1.msra.mxu0 %v834
    %1582 = vmatprep.subr.mxu0 %v840
    %1583 = vmatpush1.msra.mxu0 %v839
    %1584 = vmatprep.subr.mxu0 %v845
    %1585 = vmatpush1.msra.mxu0 %v844
    %1586 = vmatprep.subr.mxu0 %v850
    %1587 = vmatpush1.msra.mxu0 %v849
    %1588 = vmatprep.subr.mxu0 %v855
    %1589 = vmatpush1.msra.mxu0 %v854
    %1590 = vmatprep.subr.mxu0 %v860
    %1591 = vmatpush1.msra.mxu0 %v859
    %1592 = vmatprep.mubr.f32.mxu0 %v61
    %1593 = vmatmul.mubr.f32.gmra.mrb[0].mxu0 %v60
    %v1594 = vpop.f32.mrb[0].mxu0
    %v1595 = vadd.f32 %v1524, %v1594
    %v1596 = vpop.f32.mrb[0].mxu0
    %v1597 = vadd.f32 %v1526, %v1596
    %1598 = vdwg.mxu0
    %1599 = vmatprep.subr.mxu0 0.0
    %1600 = vmatpush1.msra.mxu0 %v66
    %1601 = vmatprep.subr.mxu0 0.0
    %1602 = vmatpush1.msra.mxu0 %v71
    %1603 = vmatprep.subr.mxu0 0.0
    %1604 = vmatpush1.msra.mxu0 %v76
    %1605 = vmatprep.subr.mxu0 0.0
    %1606 = vmatpush1.msra.mxu0 %v81
    %1607 = vmatprep.subr.mxu0 0.0
    %1608 = vmatpush1.msra.mxu0 %v86
    %1609 = vmatprep.subr.mxu0 0.0
    %1610 = vmatpush1.msra.mxu0 %v91
    %1611 = vmatprep.subr.mxu0 0.0
    %1612 = vmatpush1.msra.mxu0 %v96
    %1613 = vmatprep.subr.mxu0 0.0
    %1614 = vmatpush1.msra.mxu0 %v101
    %1615 = vmatprep.subr.mxu0 0.0
    %1616 = vmatpush1.msra.mxu0 %v106
    %1617 = vmatprep.subr.mxu0 0.0
    %1618 = vmatpush1.msra.mxu0 %v111
    %1619 = vmatprep.subr.mxu0 0.0
    %1620 = vmatpush1.msra.mxu0 %v116
    %1621 = vmatprep.subr.mxu0 0.0
    %1622 = vmatpush1.msra.mxu0 %v121
    %1623 = vmatprep.subr.mxu0 0.0
    %1624 = vmatpush1.msra.mxu0 %v126
    %1625 = vmatprep.subr.mxu0 0.0
    %1626 = vmatpush1.msra.mxu0 %v131
    %1627 = vmatprep.subr.mxu0 0.0
    %1628 = vmatpush1.msra.mxu0 %v136
    %1629 = vmatprep.subr.mxu0 0.0
    %1630 = vmatpush1.msra.mxu0 %v141
    %1631 = vmatprep.subr.mxu0 0.0
    %1632 = vmatpush1.msra.mxu0 %v146
    %1633 = vmatprep.subr.mxu0 0.0
    %1634 = vmatpush1.msra.mxu0 %v151
    %1635 = vmatprep.subr.mxu0 0.0
    %1636 = vmatpush1.msra.mxu0 %v156
    %1637 = vmatprep.subr.mxu0 0.0
    %1638 = vmatpush1.msra.mxu0 %v161
    %1639 = vmatprep.subr.mxu0 0.0
    %1640 = vmatpush1.msra.mxu0 %v166
    %1641 = vmatprep.subr.mxu0 0.0
    %1642 = vmatpush1.msra.mxu0 %v171
    %1643 = vmatprep.subr.mxu0 0.0
    %1644 = vmatpush1.msra.mxu0 %v176
    %1645 = vmatprep.subr.mxu0 0.0
    %1646 = vmatpush1.msra.mxu0 %v181
    %1647 = vmatprep.subr.mxu0 0.0
    %1648 = vmatpush1.msra.mxu0 %v186
    %1649 = vmatprep.subr.mxu0 0.0
    %1650 = vmatpush1.msra.mxu0 %v191
    %1651 = vmatprep.subr.mxu0 0.0
    %1652 = vmatpush1.msra.mxu0 %v196
    %1653 = vmatprep.subr.mxu0 0.0
    %1654 = vmatpush1.msra.mxu0 %v201
    %1655 = vmatprep.subr.mxu0 0.0
    %1656 = vmatpush1.msra.mxu0 %v206
    %1657 = vmatprep.subr.mxu0 0.0
    %1658 = vmatpush1.msra.mxu0 %v211
    %1659 = vmatprep.subr.mxu0 0.0
    %1660 = vmatpush1.msra.mxu0 %v216
    %1661 = vmatprep.subr.mxu0 0.0
    %1662 = vmatpush1.msra.mxu0 %v221
    %1663 = vmatprep.mubr.f32.mxu0 %v53
    %1664 = vmatmul.mubr.f32.gmra.mrb[0].mxu0 %v52
    %v1665 = vpop.f32.mrb[0].mxu0
    %v1666 = vadd.f32 %v883, %v1665
    %v1667 = vpop.f32.mrb[0].mxu0
    %1668 = vdwg.mxu0
    %1669 = vmatprep.subr.mxu0 0.0
    %1670 = vmatpush1.msra.mxu0 %v226
    %1671 = vmatprep.subr.mxu0 0.0
    %1672 = vmatpush1.msra.mxu0 %v231
    %1673 = vmatprep.subr.mxu0 0.0
    %1674 = vmatpush1.msra.mxu0 %v236
    %1675 = vmatprep.subr.mxu0 0.0
    %1676 = vmatpush1.msra.mxu0 %v241
    %1677 = vmatprep.subr.mxu0 0.0
    %1678 = vmatpush1.msra.mxu0 %v246
    %1679 = vmatprep.subr.mxu0 0.0
    %1680 = vmatpush1.msra.mxu0 %v251
    %1681 = vmatprep.subr.mxu0 0.0
    %1682 = vmatpush1.msra.mxu0 %v256
    %1683 = vmatprep.subr.mxu0 0.0
    %1684 = vmatpush1.msra.mxu0 %v261
    %1685 = vmatprep.subr.mxu0 0.0
    %1686 = vmatpush1.msra.mxu0 %v266
    %1687 = vmatprep.subr.mxu0 0.0
    %1688 = vmatpush1.msra.mxu0 %v271
    %1689 = vmatprep.subr.mxu0 0.0
    %1690 = vmatpush1.msra.mxu0 %v276
    %1691 = vmatprep.subr.mxu0 0.0
    %1692 = vmatpush1.msra.mxu0 %v281
    %1693 = vmatprep.subr.mxu0 0.0
    %1694 = vmatpush1.msra.mxu0 %v286
    %1695 = vmatprep.subr.mxu0 0.0
    %1696 = vmatpush1.msra.mxu0 %v291
    %1697 = vmatprep.subr.mxu0 0.0
    %1698 = vmatpush1.msra.mxu0 %v296
    %1699 = vmatprep.subr.mxu0 0.0
    %1700 = vmatpush1.msra.mxu0 %v301
    %1701 = vmatprep.subr.mxu0 0.0
    %1702 = vmatpush1.msra.mxu0 %v306
    %1703 = vmatprep.subr.mxu0 0.0
    %1704 = vmatpush1.msra.mxu0 %v311
    %1705 = vmatprep.subr.mxu0 0.0
    %1706 = vmatpush1.msra.mxu0 %v316
    %1707 = vmatprep.subr.mxu0 0.0
    %1708 = vmatpush1.msra.mxu0 %v321
    %1709 = vmatprep.subr.mxu0 0.0
    %1710 = vmatpush1.msra.mxu0 %v326
    %1711 = vmatprep.subr.mxu0 0.0
    %1712 = vmatpush1.msra.mxu0 %v331
    %1713 = vmatprep.subr.mxu0 0.0
    %1714 = vmatpush1.msra.mxu0 %v336
    %1715 = vmatprep.subr.mxu0 0.0
    %1716 = vmatpush1.msra.mxu0 %v341
    %1717 = vmatprep.subr.mxu0 0.0
    %1718 = vmatpush1.msra.mxu0 %v346
    %1719 = vmatprep.subr.mxu0 0.0
    %1720 = vmatpush1.msra.mxu0 %v351
    %1721 = vmatprep.subr.mxu0 0.0
    %1722 = vmatpush1.msra.mxu0 %v356
    %1723 = vmatprep.subr.mxu0 0.0
    %1724 = vmatpush1.msra.mxu0 %v361
    %1725 = vmatprep.subr.mxu0 0.0
    %1726 = vmatpush1.msra.mxu0 %v366
    %1727 = vmatprep.subr.mxu0 0.0
    %1728 = vmatpush1.msra.mxu0 %v371
    %1729 = vmatprep.subr.mxu0 0.0
    %1730 = vmatpush1.msra.mxu0 %v376
    %1731 = vmatprep.subr.mxu0 0.0
    %1732 = vmatpush1.msra.mxu0 %v381
    %1733 = vmatprep.mubr.f32.mxu0 %v55
    %1734 = vmatmul.mubr.f32.gmra.mrb[0].mxu0 %v54
    %v1735 = vpop.f32.mrb[0].mxu0
    %v1736 = vadd.f32 %v1666, %v1735
    %v1737 = vpop.f32.mrb[0].mxu0
    %1738 = vdwg.mxu0
    %1739 = vmatprep.subr.mxu0 0.0
    %1740 = vmatpush1.msra.mxu0 %v386
    %1741 = vmatprep.subr.mxu0 0.0
    %1742 = vmatpush1.msra.mxu0 %v391
    %1743 = vmatprep.subr.mxu0 0.0
    %1744 = vmatpush1.msra.mxu0 %v396
    %1745 = vmatprep.subr.mxu0 0.0
    %1746 = vmatpush1.msra.mxu0 %v401
    %1747 = vmatprep.subr.mxu0 0.0
    %1748 = vmatpush1.msra.mxu0 %v406
    %1749 = vmatprep.subr.mxu0 0.0
    %1750 = vmatpush1.msra.mxu0 %v411
    %1751 = vmatprep.subr.mxu0 0.0
    %1752 = vmatpush1.msra.mxu0 %v416
    %1753 = vmatprep.subr.mxu0 0.0
    %1754 = vmatpush1.msra.mxu0 %v421
    %1755 = vmatprep.subr.mxu0 0.0
    %1756 = vmatpush1.msra.mxu0 %v426
    %1757 = vmatprep.subr.mxu0 0.0
    %1758 = vmatpush1.msra.mxu0 %v431
    %1759 = vmatprep.subr.mxu0 0.0
    %1760 = vmatpush1.msra.mxu0 %v436
    %1761 = vmatprep.subr.mxu0 0.0
    %1762 = vmatpush1.msra.mxu0 %v441
    %1763 = vmatprep.subr.mxu0 0.0
    %1764 = vmatpush1.msra.mxu0 %v446
    %1765 = vmatprep.subr.mxu0 0.0
    %1766 = vmatpush1.msra.mxu0 %v451
    %1767 = vmatprep.subr.mxu0 0.0
    %1768 = vmatpush1.msra.mxu0 %v456
    %1769 = vmatprep.subr.mxu0 0.0
    %1770 = vmatpush1.msra.mxu0 %v461
    %1771 = vmatprep.subr.mxu0 0.0
    %1772 = vmatpush1.msra.mxu0 %v466
    %1773 = vmatprep.subr.mxu0 0.0
    %1774 = vmatpush1.msra.mxu0 %v471
    %1775 = vmatprep.subr.mxu0 0.0
    %1776 = vmatpush1.msra.mxu0 %v476
    %1777 = vmatprep.subr.mxu0 0.0
    %1778 = vmatpush1.msra.mxu0 %v481
    %1779 = vmatprep.subr.mxu0 0.0
    %1780 = vmatpush1.msra.mxu0 %v486
    %1781 = vmatprep.subr.mxu0 0.0
    %1782 = vmatpush1.msra.mxu0 %v491
    %1783 = vmatprep.subr.mxu0 0.0
    %1784 = vmatpush1.msra.mxu0 %v496
    %1785 = vmatprep.subr.mxu0 0.0
    %1786 = vmatpush1.msra.mxu0 %v501
    %1787 = vmatprep.subr.mxu0 0.0
    %1788 = vmatpush1.msra.mxu0 %v506
    %1789 = vmatprep.subr.mxu0 0.0
    %1790 = vmatpush1.msra.mxu0 %v511
    %1791 = vmatprep.subr.mxu0 0.0
    %1792 = vmatpush1.msra.mxu0 %v516
    %1793 = vmatprep.subr.mxu0 0.0
    %1794 = vmatpush1.msra.mxu0 %v521
    %1795 = vmatprep.subr.mxu0 0.0
    %1796 = vmatpush1.msra.mxu0 %v526
    %1797 = vmatprep.subr.mxu0 0.0
    %1798 = vmatpush1.msra.mxu0 %v531
    %1799 = vmatprep.subr.mxu0 0.0
    %1800 = vmatpush1.msra.mxu0 %v536
    %1801 = vmatprep.subr.mxu0 0.0
    %1802 = vmatpush1.msra.mxu0 %v541
    %1803 = vmatprep.mubr.f32.mxu0 %v57
    %1804 = vmatmul.mubr.f32.gmra.mrb[0].mxu0 %v56
    %v1805 = vpop.f32.mrb[0].mxu0
    %v1806 = vadd.f32 %v1736, %v1805
    %v1807 = vpop.f32.mrb[0].mxu0
    %1808 = vdwg.mxu0
    %1809 = vmatprep.subr.mxu0 0.0
    %1810 = vmatpush1.msra.mxu0 %v546
    %1811 = vmatprep.subr.mxu0 0.0
    %1812 = vmatpush1.msra.mxu0 %v551
    %1813 = vmatprep.subr.mxu0 0.0
    %1814 = vmatpush1.msra.mxu0 %v556
    %1815 = vmatprep.subr.mxu0 0.0
    %1816 = vmatpush1.msra.mxu0 %v561
    %1817 = vmatprep.subr.mxu0 0.0
    %1818 = vmatpush1.msra.mxu0 %v566
    %1819 = vmatprep.subr.mxu0 0.0
    %1820 = vmatpush1.msra.mxu0 %v571
    %1821 = vmatprep.subr.mxu0 0.0
    %1822 = vmatpush1.msra.mxu0 %v576
    %1823 = vmatprep.subr.mxu0 0.0
    %1824 = vmatpush1.msra.mxu0 %v581
    %1825 = vmatprep.subr.mxu0 0.0
    %1826 = vmatpush1.msra.mxu0 %v586
    %1827 = vmatprep.subr.mxu0 0.0
    %1828 = vmatpush1.msra.mxu0 %v591
    %1829 = vmatprep.subr.mxu0 0.0
    %1830 = vmatpush1.msra.mxu0 %v596
    %1831 = vmatprep.subr.mxu0 0.0
    %1832 = vmatpush1.msra.mxu0 %v601
    %1833 = vmatprep.subr.mxu0 0.0
    %1834 = vmatpush1.msra.mxu0 %v606
    %1835 = vmatprep.subr.mxu0 0.0
    %1836 = vmatpush1.msra.mxu0 %v611
    %1837 = vmatprep.subr.mxu0 0.0
    %1838 = vmatpush1.msra.mxu0 %v616
    %1839 = vmatprep.subr.mxu0 0.0
    %1840 = vmatpush1.msra.mxu0 %v621
    %1841 = vmatprep.subr.mxu0 0.0
    %1842 = vmatpush1.msra.mxu0 %v626
    %1843 = vmatprep.subr.mxu0 0.0
    %1844 = vmatpush1.msra.mxu0 %v631
    %1845 = vmatprep.subr.mxu0 0.0
    %1846 = vmatpush1.msra.mxu0 %v636
    %1847 = vmatprep.subr.mxu0 0.0
    %1848 = vmatpush1.msra.mxu0 %v641
    %1849 = vmatprep.subr.mxu0 0.0
    %1850 = vmatpush1.msra.mxu0 %v646
    %1851 = vmatprep.subr.mxu0 0.0
    %1852 = vmatpush1.msra.mxu0 %v651
    %1853 = vmatprep.subr.mxu0 0.0
    %1854 = vmatpush1.msra.mxu0 %v656
    %1855 = vmatprep.subr.mxu0 0.0
    %1856 = vmatpush1.msra.mxu0 %v661
    %1857 = vmatprep.subr.mxu0 0.0
    %1858 = vmatpush1.msra.mxu0 %v666
    %1859 = vmatprep.subr.mxu0 0.0
    %1860 = vmatpush1.msra.mxu0 %v671
    %1861 = vmatprep.subr.mxu0 0.0
    %1862 = vmatpush1.msra.mxu0 %v676
    %1863 = vmatprep.subr.mxu0 0.0
    %1864 = vmatpush1.msra.mxu0 %v681
    %1865 = vmatprep.subr.mxu0 0.0
    %1866 = vmatpush1.msra.mxu0 %v686
    %1867 = vmatprep.subr.mxu0 0.0
    %1868 = vmatpush1.msra.mxu0 %v691
    %1869 = vmatprep.subr.mxu0 0.0
    %1870 = vmatpush1.msra.mxu0 %v696
    %1871 = vmatprep.subr.mxu0 0.0
    %1872 = vmatpush1.msra.mxu0 %v701
    %1873 = vmatprep.mubr.f32.mxu0 %v59
    %1874 = vmatmul.mubr.f32.gmra.mrb[0].mxu0 %v58
    %v1875 = vpop.f32.mrb[0].mxu0
    %v1876 = vadd.f32 %v1806, %v1875
    %v1877 = vpop.f32.mrb[0].mxu0
    %1878 = vdwg.mxu0
    %1879 = vmatprep.subr.mxu0 0.0
    %1880 = vmatpush1.msra.mxu0 %v706
    %1881 = vmatprep.subr.mxu0 0.0
    %1882 = vmatpush1.msra.mxu0 %v711
    %1883 = vmatprep.subr.mxu0 0.0
    %1884 = vmatpush1.msra.mxu0 %v716
    %1885 = vmatprep.subr.mxu0 0.0
    %1886 = vmatpush1.msra.mxu0 %v721
    %1887 = vmatprep.subr.mxu0 0.0
    %1888 = vmatpush1.msra.mxu0 %v726
    %1889 = vmatprep.subr.mxu0 0.0
    %1890 = vmatpush1.msra.mxu0 %v731
    %1891 = vmatprep.subr.mxu0 0.0
    %1892 = vmatpush1.msra.mxu0 %v736
    %1893 = vmatprep.subr.mxu0 0.0
    %1894 = vmatpush1.msra.mxu0 %v741
    %1895 = vmatprep.subr.mxu0 0.0
    %1896 = vmatpush1.msra.mxu0 %v746
    %1897 = vmatprep.subr.mxu0 0.0
    %1898 = vmatpush1.msra.mxu0 %v751
    %1899 = vmatprep.subr.mxu0 0.0
    %1900 = vmatpush1.msra.mxu0 %v756
    %1901 = vmatprep.subr.mxu0 0.0
    %1902 = vmatpush1.msra.mxu0 %v761
    %1903 = vmatprep.subr.mxu0 0.0
    %1904 = vmatpush1.msra.mxu0 %v766
    %1905 = vmatprep.subr.mxu0 0.0
    %1906 = vmatpush1.msra.mxu0 %v771
    %1907 = vmatprep.subr.mxu0 0.0
    %1908 = vmatpush1.msra.mxu0 %v776
    %1909 = vmatprep.subr.mxu0 0.0
    %1910 = vmatpush1.msra.mxu0 %v781
    %1911 = vmatprep.subr.mxu0 0.0
    %1912 = vmatpush1.msra.mxu0 %v786
    %1913 = vmatprep.subr.mxu0 0.0
    %1914 = vmatpush1.msra.mxu0 %v791
    %1915 = vmatprep.subr.mxu0 0.0
    %1916 = vmatpush1.msra.mxu0 %v796
    %1917 = vmatprep.subr.mxu0 0.0
    %1918 = vmatpush1.msra.mxu0 %v801
    %1919 = vmatprep.subr.mxu0 0.0
    %1920 = vmatpush1.msra.mxu0 %v806
    %1921 = vmatprep.subr.mxu0 0.0
    %1922 = vmatpush1.msra.mxu0 %v811
    %1923 = vmatprep.subr.mxu0 0.0
    %1924 = vmatpush1.msra.mxu0 %v816
    %1925 = vmatprep.subr.mxu0 0.0
    %1926 = vmatpush1.msra.mxu0 %v821
    %1927 = vmatprep.subr.mxu0 0.0
    %1928 = vmatpush1.msra.mxu0 %v826
    %1929 = vmatprep.subr.mxu0 0.0
    %1930 = vmatpush1.msra.mxu0 %v831
    %1931 = vmatprep.subr.mxu0 0.0
    %1932 = vmatpush1.msra.mxu0 %v836
    %1933 = vmatprep.subr.mxu0 0.0
    %1934 = vmatpush1.msra.mxu0 %v841
    %1935 = vmatprep.subr.mxu0 0.0
    %1936 = vmatpush1.msra.mxu0 %v846
    %1937 = vmatprep.subr.mxu0 0.0
    %1938 = vmatpush1.msra.mxu0 %v851
    %1939 = vmatprep.subr.mxu0 0.0
    %1940 = vmatpush1.msra.mxu0 %v856
    %1941 = vmatprep.subr.mxu0 0.0
    %1942 = vmatpush1.msra.mxu0 %v861
    %1943 = vmatprep.mubr.f32.mxu0 %v61
    %1944 = vmatmul.mubr.f32.gmra.mrb[0].mxu0 %v60
    %v1945 = vpop.f32.mrb[0].mxu0
    %v1946 = vadd.f32 %v1876, %v1945
    %v1947 = vpop.f32.mrb[0].mxu0
    %1948 = vdwg.mxu0
    %1949 = vst [vmem:[#allocation8] sm:$0xff] %v1240
    %1950 = vst [vmem:[#allocation8 + $0x8] sm:$0xff] %v1242
    %1951 = vst [vmem:[#allocation8 + $0x10] sm:$0xff] %v1595
    %1952 = vst [vmem:[#allocation8 + $0x18] sm:$0xff] %v1597
    %1953 = vst [vmem:[#allocation8 + $0x20] sm:$0xff] %v1946
    // Predicated region
    $region26: #{tpu_custom_call.1} parent=1 // pred_check
      _
    $region27: #{tpu_custom_call.1} parent=1 // pred_check_branch
      %1955 = sbr.rel (0) target = $region29
    $region28: #{tpu_custom_call.1} parent=1 // pred_region
      %s1957 = ssub.s32 640, 640
      %1958 = vsyncadd [#allocation4], %s1957
      %s1960 = sshll.u32 [#allocation8], 4
      %s1961 = int_to_ptr.vmem [resolvable:$true] %s1960
      %1963 = dma.vmem_to_hbm [thread:$0]  %s1961, 640, %s3, [#allocation4]
    $region29: #{tpu_custom_call.1} parent=1 // pred_fallthru
      _
    // Predicated region
    $region30: #{tpu_custom_call.1} parent=1 // pred_check
      _
    $region31: #{tpu_custom_call.1} parent=1 // pred_check_branch
      %1965 = sbr.rel (0) target = $region33
    $region32: #{tpu_custom_call.1} parent=1 // pred_region
      %1966 = dma.done [#allocation4], 640
    $region33: #{tpu_custom_call.1} parent=1 // pred_fallthru
      _
    %1967 = vsyncpa [#allocation3], 1
    %1968 = vsyncpa [#allocation6], 1
    %1969 = vsyncpa [#allocation4], 1

</llo_original>
